<compile_context>
chip_gen: v7x
topology: tpu7x:2x2x1
jax: 0.10.0
libtpu: 0.0.40
codegen_flags: <defaults>
</compile_context>

<pallas_src>
import functools

import jax
import jax.numpy as jnp
import numpy as np
from jax.experimental import pallas as pl
from jax.experimental.pallas import tpu as pltpu

# ----------------------------- model config ---------------------------------
HIDDEN_SIZE = 32
NUM_LAYERS = 2
DROPOUT = 0.0            # eval mode -> dropout is identity

NUM_ASSETS = 4
WINDOW_SIZE = 8
NUM_FEATURES_ORIGINAL = 4
NUM_FEATURES_AUGMENTED = 4   # unused by forward, kept for signature parity
BATCH = 2

# MXU operand dtype (f32 accumulation / f32 state everywhere else).
MXU_DTYPE = jnp.bfloat16

# The wavefront / packed-RHS kernel below is specialized to the configured depth.
assert NUM_LAYERS == 2, "wavefront packing in the kernel is specialized to 2 layers"


# ----------------------------- Pallas kernel --------------------------------
def _wavefront_lstm_fc_kernel(x_ref, w0_ref, b0_ref, rhs_ref, b1_ref,
                              fc_w_ref, fc_b_ref, out_ref, *,
                              batch_eff, hidden, seq_len):
    """Fused 2-layer LSTM (wavefront schedule) + final Linear, single invocation.

    Refs (all full-array VMEM blocks):
      x_ref    : (T*B, D0)  f32   time-major input  (row = t*B + b)
      w0_ref   : (D0, 4H)   f32   layer-0 input weights (transposed)
      b0_ref   : (1, 4H)    f32   layer-0 bias (b_ih + b_hh)
      rhs_ref  : (H, 12H)   bf16  packed [W_hh0 | W_ih1 | W_hh1] (each transposed)
      b1_ref   : (1, 4H)    f32   layer-1 bias (b_ih + b_hh)
      fc_w_ref : (1, H)     f32
      fc_b_ref : (1, 1)     f32
      out_ref  : (B, 1)     f32
    """
    B, H, T = batch_eff, hidden, seq_len
    G = 4 * H

    # Hoisted lane masks / constants for the combined gate activation:
    #   sigmoid(x) = 0.5 * (tanh(x / 2) + 1)   -> one tanh pass per gate vreg.
    lane = jax.lax.broadcasted_iota(jnp.int32, (B, G), 1)
    is_g = jnp.logical_and(lane >= 2 * H, lane < 3 * H)        # "g" gate lanes
    pre_scale = jnp.where(is_g, 1.0, 0.5).astype(jnp.float32)   # x or x/2
    post_scale = pre_scale                                       # 1*y or 0.5*y
    post_bias = jnp.where(is_g, 0.0, 0.5).astype(jnp.float32)    # +0 or +0.5

    def cell(gates, c):
        y = jnp.tanh(gates * pre_scale)          # single EUP pass over (B, 4H)
        act = y * post_scale + post_bias         # tanh on g lanes, sigmoid elsewhere
        i_g = act[:, 0 * H:1 * H]
        f_g = act[:, 1 * H:2 * H]
        g_g = act[:, 2 * H:3 * H]
        o_g = act[:, 3 * H:4 * H]
        c_new = f_g * c + i_g * g_g
        h_new = o_g * jnp.tanh(c_new)
        return h_new, c_new

    # ---- layer-0 input projection for ALL timesteps at once, on the VPU.
    # K = D0 = 4 is far too narrow to feed the MXU usefully, so use 4 outer-product
    # multiply-adds (bias folded in).  Time-independent -> off the serial chain.
    x = x_ref[...]                                # (T*B, D0)
    w0 = w0_ref[...]                              # (D0, 4H)
    pre0 = x[:, 0:1] * w0[0:1, :] + b0_ref[...]   # (T*B, 4H)
    for d in range(1, x.shape[1]):
        pre0 = pre0 + x[:, d:d + 1] * w0[d:d + 1, :]

    rhs = rhs_ref[...]                            # (H, 12H) bf16
    b1 = b1_ref[...]                              # (1, 4H)

    zeros = jnp.zeros((B, H), jnp.float32)
    h0, c0 = zeros, zeros                         # layer-0 state (f32)
    h1, c1 = zeros, zeros                         # layer-1 state (f32)

    # Wavefront schedule: step s computes layer-0 time s and layer-1 time s-1.
    # Both consume the *entering* h0 (= h0_{s-1}), so their matmuls are packed into
    # a single (2B, H) x (H, 12H) MXU push per step.
    for s in range(T + 1):
        if s == 0:
            # t = 0, layer 0: h_{-1} = 0 -> no recurrent matmul needed at all.
            h0, c0 = cell(pre0[0:B, :], c0)
            continue

        lhs = jnp.concatenate([h0, h1], axis=0).astype(rhs.dtype)   # (2B, H) bf16
        mm = jnp.dot(lhs, rhs, preferred_element_type=jnp.float32)  # (2B, 12H) f32

        # layer 1, time step s-1: gates = h0_{s-1} @ W_ih1 + h1_{s-2} @ W_hh1 + b1
        gates1 = b1 + mm[0:B, G:2 * G] + mm[B:2 * B, 2 * G:3 * G]
        h1_new, c1_new = cell(gates1, c1)

        # layer 0, time step s: gates = pre0[s] + h0_{s-1} @ W_hh0
        if s < T:
            gates0 = pre0[s * B:(s + 1) * B, :] + mm[0:B, 0:G]
            h0, c0 = cell(gates0, c0)

        h1, c1 = h1_new, c1_new

    # Dropout (eval mode, p=0.0) is identity.
    # Final Linear(H, 1): VPU mul + lane reduction (avoids an Nx1 matmul).
    logits = jnp.sum(h1 * fc_w_ref[...], axis=-1, keepdims=True) + fc_b_ref[...]
    out_ref[...] = logits.astype(out_ref.dtype)


# ----------------------------- wrapper ---------------------------------------
def lstm_model_forward(x, params):
    """Forward pass equivalent to the PyTorch LSTM module (eval mode)."""
    batch = x.shape[0]
    b_eff = batch * NUM_ASSETS
    xr = x.reshape(b_eff, WINDOW_SIZE, NUM_FEATURES_ORIGINAL)        # (B_eff, T, D0)
    # Time-major flat layout (row = t*B_eff + b): per-timestep access in the kernel
    # is a static, sublane-aligned slice; no in-kernel reshapes needed.
    x_tm = jnp.transpose(xr, (1, 0, 2)).reshape(
        WINDOW_SIZE * b_eff, NUM_FEATURES_ORIGINAL)                  # (T*B_eff, D0)

    inputs = [
        x_tm,
        params["x_proj_w"],     # (D0, 4H)  f32
        params["x_proj_b"],     # (1, 4H)   f32
        params["rhs_packed"],   # (H, 12H)  bf16  [W_hh0 | W_ih1 | W_hh1]
        params["b1"],           # (1, 4H)   f32
        params["fc_w"],         # (1, H)    f32
        params["fc_b"],         # (1, 1)    f32
    ]

    kernel = functools.partial(
        _wavefront_lstm_fc_kernel,
        batch_eff=b_eff,
        hidden=HIDDEN_SIZE,
        seq_len=WINDOW_SIZE,
    )

    logits = pl.pallas_call(
        kernel,
        out_shape=jax.ShapeDtypeStruct((b_eff, 1), jnp.float32),
        in_specs=[pl.BlockSpec(memory_space=pltpu.MemorySpace.VMEM)] * len(inputs),
        out_specs=pl.BlockSpec(memory_space=pltpu.MemorySpace.VMEM),
    )(*inputs)

    return logits.reshape(batch, NUM_ASSETS)


# ----------------------------- param init ------------------------------------
def init_params(key):
    """PyTorch-style uniform(-1/sqrt(H), 1/sqrt(H)) init + kernel-layout packing."""
    k = 1.0 / np.sqrt(HIDDEN_SIZE)
    ref_layers = []
    for layer in range(NUM_LAYERS):
        d_in = NUM_FEATURES_ORIGINAL if layer == 0 else HIDDEN_SIZE
        key, k1, k2, k3, k4 = jax.random.split(key, 5)
        w_ih = jax.random.uniform(k1, (4 * HIDDEN_SIZE, d_in), jnp.float32, -k, k)
        w_hh = jax.random.uniform(k2, (4 * HIDDEN_SIZE, HIDDEN_SIZE), jnp.float32, -k, k)
        b_ih = jax.random.uniform(k3, (4 * HIDDEN_SIZE,), jnp.float32, -k, k)
        b_hh = jax.random.uniform(k4, (4 * HIDDEN_SIZE,), jnp.float32, -k, k)
        ref_layers.append((w_ih.T, w_hh.T, (b_ih + b_hh).reshape(1, 4 * HIDDEN_SIZE)))
    key, k5, k6 = jax.random.split(key, 3)
    fc_w = jax.random.uniform(k5, (1, HIDDEN_SIZE), jnp.float32, -k, k)
    fc_b = jax.random.uniform(k6, (1,), jnp.float32, -k, k)

    (w_ih0_t, w_hh0_t, b0) = ref_layers[0]
    (w_ih1_t, w_hh1_t, b1) = ref_layers[1]
    # Packed recurrent RHS, cast to the MXU operand dtype once at init time.
    rhs_packed = jnp.concatenate([w_hh0_t, w_ih1_t, w_hh1_t], axis=1).astype(MXU_DTYPE)

    return {
        "x_proj_w": w_ih0_t,
        "x_proj_b": b0,
        "rhs_packed": rhs_packed,
        "b1": b1,
        "fc_w": fc_w,
        "fc_b": fc_b.reshape(1, 1),
        "ref_layers": ref_layers,   # f32 copies for the pure-JAX reference
    }


# ----------------------------- pure-JAX reference ----------------------------
def _reference_forward(x, params):
    batch = x.shape[0]
    xr = x.reshape(batch * NUM_ASSETS, WINDOW_SIZE, NUM_FEATURES_ORIGINAL)
    seq = xr
    for (w_ih_t, w_hh_t, bias_row) in params["ref_layers"]:
        B, T, _ = seq.shape
        H = HIDDEN_SIZE
        h = jnp.zeros((B, H), jnp.float32)
        c = jnp.zeros((B, H), jnp.float32)
        outs = []
        for t in range(T):
            gates = seq[:, t, :] @ w_ih_t + h @ w_hh_t + bias_row
            i = jax.nn.sigmoid(gates[:, 0 * H:1 * H])
            f = jax.nn.sigmoid(gates[:, 1 * H:2 * H])
            g = jnp.tanh(gates[:, 2 * H:3 * H])
            o = jax.nn.sigmoid(gates[:, 3 * H:4 * H])
            c = f * c + i * g
            h = o * jnp.tanh(c)
            outs.append(h)
        seq = jnp.stack(outs, axis=1)
    h_last = seq[:, -1, :]
    out = h_last @ params["fc_w"].T + params["fc_b"]
    return out.reshape(batch, NUM_ASSETS)


# ----------------------------- main -------------------------------------------
if __name__ == "__main__":
    key = jax.random.PRNGKey(0)
    key, pkey, xkey = jax.random.split(key, 3)
    params = init_params(pkey)

    total_feat = NUM_ASSETS * WINDOW_SIZE * NUM_FEATURES_ORIGINAL
    x = jax.random.normal(xkey, (BATCH, total_feat), jnp.float32)

    fwd = jax.jit(lstm_model_forward)
    out = jax.block_until_ready(fwd(x, params))

    ref = jax.block_until_ready(_reference_forward(x, params))
    # Tolerance loosened vs the pure-f32 reference because the recurrent matmuls use
    # bf16 MXU operands (f32 accumulation/state), per the performance review.
    np.testing.assert_allclose(np.asarray(out), np.asarray(ref),
                               rtol=2e-2, atol=2e-2)
    assert out.shape == (BATCH, NUM_ASSETS)
    print("KERNEL_OK")
</pallas_src>

<mosaic_0001>
module attributes {stable_mosaic.version = 11 : i64} {
  func.func @_wavefront_lstm_fc_kernel(%arg0: memref<64x4xf32, #tpu.memory_space<vmem>>, %arg1: memref<4x128xf32, #tpu.memory_space<vmem>>, %arg2: memref<1x128xf32, #tpu.memory_space<vmem>>, %arg3: memref<32x384xbf16, #tpu.memory_space<vmem>>, %arg4: memref<1x128xf32, #tpu.memory_space<vmem>>, %arg5: memref<1x32xf32, #tpu.memory_space<vmem>>, %arg6: memref<1x1xf32, #tpu.memory_space<vmem>>, %arg7: memref<8x1xf32, #tpu.memory_space<vmem>>) attributes {dimension_semantics = [], scalar_prefetch = 0 : i64, scratch_operands = 0 : i64, tpu.core_type = #tpu.core_type<tc>} {
    %0 = tpu.iota {dimensions = array<i32: 1>} : vector<8x128xi32>
    %c64_i32 = arith.constant 64 : i32
    %1 = vector.broadcast %c64_i32 : i32 to vector<8x128xi32>
    %2 = arith.cmpi sge, %0, %1 : vector<8x128xi32>
    %c96_i32 = arith.constant 96 : i32
    %3 = vector.broadcast %c96_i32 : i32 to vector<8x128xi32>
    %4 = arith.cmpi slt, %0, %3 : vector<8x128xi32>
    %5 = arith.andi %2, %4 : vector<8x128xi1>
    %cst = arith.constant 1.000000e+00 : f32
    %cst_0 = arith.constant 5.000000e-01 : f32
    %6 = vector.broadcast %cst : f32 to vector<8x128xf32>
    %7 = vector.broadcast %cst_0 : f32 to vector<8x128xf32>
    %8 = arith.select %5, %6, %7 : vector<8x128xi1>, vector<8x128xf32>
    %cst_1 = arith.constant 0.000000e+00 : f32
    %cst_2 = arith.constant 5.000000e-01 : f32
    %9 = vector.broadcast %cst_1 : f32 to vector<8x128xf32>
    %10 = vector.broadcast %cst_2 : f32 to vector<8x128xf32>
    %11 = arith.select %5, %9, %10 : vector<8x128xi1>, vector<8x128xf32>
    %c0 = arith.constant 0 : index
    %c0_3 = arith.constant 0 : index
    %12 = vector.load %arg0[%c0, %c0_3] : memref<64x4xf32, #tpu.memory_space<vmem>>, vector<64x4xf32>
    %c0_4 = arith.constant 0 : index
    %c0_5 = arith.constant 0 : index
    %13 = vector.load %arg1[%c0_4, %c0_5] : memref<4x128xf32, #tpu.memory_space<vmem>>, vector<4x128xf32>
    %14 = vector.extract_strided_slice %12 {offsets = [0, 0], sizes = [64, 1], strides = [1, 1]} : vector<64x4xf32> to vector<64x1xf32>
    %15 = vector.extract_strided_slice %13 {offsets = [0, 0], sizes = [1, 128], strides = [1, 1]} : vector<4x128xf32> to vector<1x128xf32>
    %16 = vector.broadcast %14 : vector<64x1xf32> to vector<64x128xf32>
    %17 = vector.broadcast %15 : vector<1x128xf32> to vector<64x128xf32>
    %18 = arith.mulf %16, %17 : vector<64x128xf32>
    %c0_6 = arith.constant 0 : index
    %c0_7 = arith.constant 0 : index
    %19 = vector.load %arg2[%c0_6, %c0_7] : memref<1x128xf32, #tpu.memory_space<vmem>>, vector<1x128xf32>
    %20 = vector.broadcast %19 : vector<1x128xf32> to vector<64x128xf32>
    %21 = arith.addf %18, %20 : vector<64x128xf32>
    %22 = vector.extract_strided_slice %12 {offsets = [0, 1], sizes = [64, 1], strides = [1, 1]} : vector<64x4xf32> to vector<64x1xf32>
    %23 = vector.extract_strided_slice %13 {offsets = [1, 0], sizes = [1, 128], strides = [1, 1]} : vector<4x128xf32> to vector<1x128xf32>
    %24 = vector.broadcast %22 : vector<64x1xf32> to vector<64x128xf32>
    %25 = vector.broadcast %23 : vector<1x128xf32> to vector<64x128xf32>
    %26 = arith.mulf %24, %25 : vector<64x128xf32>
    %27 = arith.addf %21, %26 : vector<64x128xf32>
    %28 = vector.extract_strided_slice %12 {offsets = [0, 2], sizes = [64, 1], strides = [1, 1]} : vector<64x4xf32> to vector<64x1xf32>
    %29 = vector.extract_strided_slice %13 {offsets = [2, 0], sizes = [1, 128], strides = [1, 1]} : vector<4x128xf32> to vector<1x128xf32>
    %30 = vector.broadcast %28 : vector<64x1xf32> to vector<64x128xf32>
    %31 = vector.broadcast %29 : vector<1x128xf32> to vector<64x128xf32>
    %32 = arith.mulf %30, %31 : vector<64x128xf32>
    %33 = arith.addf %27, %32 : vector<64x128xf32>
    %34 = vector.extract_strided_slice %12 {offsets = [0, 3], sizes = [64, 1], strides = [1, 1]} : vector<64x4xf32> to vector<64x1xf32>
    %35 = vector.extract_strided_slice %13 {offsets = [3, 0], sizes = [1, 128], strides = [1, 1]} : vector<4x128xf32> to vector<1x128xf32>
    %36 = vector.broadcast %34 : vector<64x1xf32> to vector<64x128xf32>
    %37 = vector.broadcast %35 : vector<1x128xf32> to vector<64x128xf32>
    %38 = arith.mulf %36, %37 : vector<64x128xf32>
    %39 = arith.addf %33, %38 : vector<64x128xf32>
    %c0_8 = arith.constant 0 : index
    %c0_9 = arith.constant 0 : index
    %40 = vector.load %arg3[%c0_8, %c0_9] : memref<32x384xbf16, #tpu.memory_space<vmem>>, vector<32x384xbf16>
    %c0_10 = arith.constant 0 : index
    %c0_11 = arith.constant 0 : index
    %41 = vector.load %arg4[%c0_10, %c0_11] : memref<1x128xf32, #tpu.memory_space<vmem>>, vector<1x128xf32>
    %cst_12 = arith.constant 0.000000e+00 : f32
    %42 = vector.broadcast %cst_12 : f32 to vector<8x32xf32>
    %43 = vector.extract_strided_slice %39 {offsets = [0, 0], sizes = [8, 128], strides = [1, 1]} : vector<64x128xf32> to vector<8x128xf32>
    %44 = arith.mulf %43, %8 : vector<8x128xf32>
    %45 = math.tanh %44 : vector<8x128xf32>
    %46 = arith.mulf %45, %8 : vector<8x128xf32>
    %47 = arith.addf %46, %11 : vector<8x128xf32>
    %48 = vector.extract_strided_slice %47 {offsets = [0, 0], sizes = [8, 32], strides = [1, 1]} : vector<8x128xf32> to vector<8x32xf32>
    %49 = vector.extract_strided_slice %47 {offsets = [0, 32], sizes = [8, 32], strides = [1, 1]} : vector<8x128xf32> to vector<8x32xf32>
    %50 = vector.extract_strided_slice %47 {offsets = [0, 64], sizes = [8, 32], strides = [1, 1]} : vector<8x128xf32> to vector<8x32xf32>
    %51 = vector.extract_strided_slice %47 {offsets = [0, 96], sizes = [8, 32], strides = [1, 1]} : vector<8x128xf32> to vector<8x32xf32>
    %52 = arith.mulf %49, %42 : vector<8x32xf32>
    %53 = arith.mulf %48, %50 : vector<8x32xf32>
    %54 = arith.addf %52, %53 : vector<8x32xf32>
    %55 = math.tanh %54 : vector<8x32xf32>
    %56 = arith.mulf %51, %55 : vector<8x32xf32>
    %57 = tpu.concatenate %56, %42 in 0 : vector<8x32xf32>, vector<8x32xf32> -> vector<16x32xf32>
    %58 = arith.truncf %57 : vector<16x32xf32> to vector<16x32xbf16>
    %cst_13 = arith.constant dense<0.000000e+00> : vector<16x384xf32>
    %59 = tpu.matmul %58, %40, %cst_13 {dimension_numbers = #tpu.dot_dimension_numbers<[1], [0], [0], [1], [0, 0, 1, 1], [], []>} : vector<16x32xbf16>, vector<32x384xbf16>, vector<16x384xf32> -> vector<16x384xf32>
    %60 = vector.extract_strided_slice %59 {offsets = [0, 128], sizes = [8, 128], strides = [1, 1]} : vector<16x384xf32> to vector<8x128xf32>
    %61 = vector.broadcast %41 : vector<1x128xf32> to vector<8x128xf32>
    %62 = arith.addf %61, %60 : vector<8x128xf32>
    %63 = vector.extract_strided_slice %59 {offsets = [8, 256], sizes = [8, 128], strides = [1, 1]} : vector<16x384xf32> to vector<8x128xf32>
    %64 = arith.addf %62, %63 : vector<8x128xf32>
    %65 = arith.mulf %64, %8 : vector<8x128xf32>
    %66 = math.tanh %65 : vector<8x128xf32>
    %67 = arith.mulf %66, %8 : vector<8x128xf32>
    %68 = arith.addf %67, %11 : vector<8x128xf32>
    %69 = vector.extract_strided_slice %68 {offsets = [0, 0], sizes = [8, 32], strides = [1, 1]} : vector<8x128xf32> to vector<8x32xf32>
    %70 = vector.extract_strided_slice %68 {offsets = [0, 32], sizes = [8, 32], strides = [1, 1]} : vector<8x128xf32> to vector<8x32xf32>
    %71 = vector.extract_strided_slice %68 {offsets = [0, 64], sizes = [8, 32], strides = [1, 1]} : vector<8x128xf32> to vector<8x32xf32>
    %72 = vector.extract_strided_slice %68 {offsets = [0, 96], sizes = [8, 32], strides = [1, 1]} : vector<8x128xf32> to vector<8x32xf32>
    %73 = arith.mulf %70, %42 : vector<8x32xf32>
    %74 = arith.mulf %69, %71 : vector<8x32xf32>
    %75 = arith.addf %73, %74 : vector<8x32xf32>
    %76 = math.tanh %75 : vector<8x32xf32>
    %77 = arith.mulf %72, %76 : vector<8x32xf32>
    %78 = vector.extract_strided_slice %39 {offsets = [8, 0], sizes = [8, 128], strides = [1, 1]} : vector<64x128xf32> to vector<8x128xf32>
    %79 = vector.extract_strided_slice %59 {offsets = [0, 0], sizes = [8, 128], strides = [1, 1]} : vector<16x384xf32> to vector<8x128xf32>
    %80 = arith.addf %78, %79 : vector<8x128xf32>
    %81 = arith.mulf %80, %8 : vector<8x128xf32>
    %82 = math.tanh %81 : vector<8x128xf32>
    %83 = arith.mulf %82, %8 : vector<8x128xf32>
    %84 = arith.addf %83, %11 : vector<8x128xf32>
    %85 = vector.extract_strided_slice %84 {offsets = [0, 0], sizes = [8, 32], strides = [1, 1]} : vector<8x128xf32> to vector<8x32xf32>
    %86 = vector.extract_strided_slice %84 {offsets = [0, 32], sizes = [8, 32], strides = [1, 1]} : vector<8x128xf32> to vector<8x32xf32>
    %87 = vector.extract_strided_slice %84 {offsets = [0, 64], sizes = [8, 32], strides = [1, 1]} : vector<8x128xf32> to vector<8x32xf32>
    %88 = vector.extract_strided_slice %84 {offsets = [0, 96], sizes = [8, 32], strides = [1, 1]} : vector<8x128xf32> to vector<8x32xf32>
    %89 = arith.mulf %86, %54 : vector<8x32xf32>
    %90 = arith.mulf %85, %87 : vector<8x32xf32>
    %91 = arith.addf %89, %90 : vector<8x32xf32>
    %92 = math.tanh %91 : vector<8x32xf32>
    %93 = arith.mulf %88, %92 : vector<8x32xf32>
    %94 = tpu.concatenate %93, %77 in 0 : vector<8x32xf32>, vector<8x32xf32> -> vector<16x32xf32>
    %95 = arith.truncf %94 : vector<16x32xf32> to vector<16x32xbf16>
    %cst_14 = arith.constant dense<0.000000e+00> : vector<16x384xf32>
    %96 = tpu.matmul %95, %40, %cst_14 {dimension_numbers = #tpu.dot_dimension_numbers<[1], [0], [0], [1], [0, 0, 1, 1], [], []>} : vector<16x32xbf16>, vector<32x384xbf16>, vector<16x384xf32> -> vector<16x384xf32>
    %97 = vector.extract_strided_slice %96 {offsets = [0, 128], sizes = [8, 128], strides = [1, 1]} : vector<16x384xf32> to vector<8x128xf32>
    %98 = vector.broadcast %41 : vector<1x128xf32> to vector<8x128xf32>
    %99 = arith.addf %98, %97 : vector<8x128xf32>
    %100 = vector.extract_strided_slice %96 {offsets = [8, 256], sizes = [8, 128], strides = [1, 1]} : vector<16x384xf32> to vector<8x128xf32>
    %101 = arith.addf %99, %100 : vector<8x128xf32>
    %102 = arith.mulf %101, %8 : vector<8x128xf32>
    %103 = math.tanh %102 : vector<8x128xf32>
    %104 = arith.mulf %103, %8 : vector<8x128xf32>
    %105 = arith.addf %104, %11 : vector<8x128xf32>
    %106 = vector.extract_strided_slice %105 {offsets = [0, 0], sizes = [8, 32], strides = [1, 1]} : vector<8x128xf32> to vector<8x32xf32>
    %107 = vector.extract_strided_slice %105 {offsets = [0, 32], sizes = [8, 32], strides = [1, 1]} : vector<8x128xf32> to vector<8x32xf32>
    %108 = vector.extract_strided_slice %105 {offsets = [0, 64], sizes = [8, 32], strides = [1, 1]} : vector<8x128xf32> to vector<8x32xf32>
    %109 = vector.extract_strided_slice %105 {offsets = [0, 96], sizes = [8, 32], strides = [1, 1]} : vector<8x128xf32> to vector<8x32xf32>
    %110 = arith.mulf %107, %75 : vector<8x32xf32>
    %111 = arith.mulf %106, %108 : vector<8x32xf32>
    %112 = arith.addf %110, %111 : vector<8x32xf32>
    %113 = math.tanh %112 : vector<8x32xf32>
    %114 = arith.mulf %109, %113 : vector<8x32xf32>
    %115 = vector.extract_strided_slice %39 {offsets = [16, 0], sizes = [8, 128], strides = [1, 1]} : vector<64x128xf32> to vector<8x128xf32>
    %116 = vector.extract_strided_slice %96 {offsets = [0, 0], sizes = [8, 128], strides = [1, 1]} : vector<16x384xf32> to vector<8x128xf32>
    %117 = arith.addf %115, %116 : vector<8x128xf32>
    %118 = arith.mulf %117, %8 : vector<8x128xf32>
    %119 = math.tanh %118 : vector<8x128xf32>
    %120 = arith.mulf %119, %8 : vector<8x128xf32>
    %121 = arith.addf %120, %11 : vector<8x128xf32>
    %122 = vector.extract_strided_slice %121 {offsets = [0, 0], sizes = [8, 32], strides = [1, 1]} : vector<8x128xf32> to vector<8x32xf32>
    %123 = vector.extract_strided_slice %121 {offsets = [0, 32], sizes = [8, 32], strides = [1, 1]} : vector<8x128xf32> to vector<8x32xf32>
    %124 = vector.extract_strided_slice %121 {offsets = [0, 64], sizes = [8, 32], strides = [1, 1]} : vector<8x128xf32> to vector<8x32xf32>
    %125 = vector.extract_strided_slice %121 {offsets = [0, 96], sizes = [8, 32], strides = [1, 1]} : vector<8x128xf32> to vector<8x32xf32>
    %126 = arith.mulf %123, %91 : vector<8x32xf32>
    %127 = arith.mulf %122, %124 : vector<8x32xf32>
    %128 = arith.addf %126, %127 : vector<8x32xf32>
    %129 = math.tanh %128 : vector<8x32xf32>
    %130 = arith.mulf %125, %129 : vector<8x32xf32>
    %131 = tpu.concatenate %130, %114 in 0 : vector<8x32xf32>, vector<8x32xf32> -> vector<16x32xf32>
    %132 = arith.truncf %131 : vector<16x32xf32> to vector<16x32xbf16>
    %cst_15 = arith.constant dense<0.000000e+00> : vector<16x384xf32>
    %133 = tpu.matmul %132, %40, %cst_15 {dimension_numbers = #tpu.dot_dimension_numbers<[1], [0], [0], [1], [0, 0, 1, 1], [], []>} : vector<16x32xbf16>, vector<32x384xbf16>, vector<16x384xf32> -> vector<16x384xf32>
    %134 = vector.extract_strided_slice %133 {offsets = [0, 128], sizes = [8, 128], strides = [1, 1]} : vector<16x384xf32> to vector<8x128xf32>
    %135 = vector.broadcast %41 : vector<1x128xf32> to vector<8x128xf32>
    %136 = arith.addf %135, %134 : vector<8x128xf32>
    %137 = vector.extract_strided_slice %133 {offsets = [8, 256], sizes = [8, 128], strides = [1, 1]} : vector<16x384xf32> to vector<8x128xf32>
    %138 = arith.addf %136, %137 : vector<8x128xf32>
    %139 = arith.mulf %138, %8 : vector<8x128xf32>
    %140 = math.tanh %139 : vector<8x128xf32>
    %141 = arith.mulf %140, %8 : vector<8x128xf32>
    %142 = arith.addf %141, %11 : vector<8x128xf32>
    %143 = vector.extract_strided_slice %142 {offsets = [0, 0], sizes = [8, 32], strides = [1, 1]} : vector<8x128xf32> to vector<8x32xf32>
    %144 = vector.extract_strided_slice %142 {offsets = [0, 32], sizes = [8, 32], strides = [1, 1]} : vector<8x128xf32> to vector<8x32xf32>
    %145 = vector.extract_strided_slice %142 {offsets = [0, 64], sizes = [8, 32], strides = [1, 1]} : vector<8x128xf32> to vector<8x32xf32>
    %146 = vector.extract_strided_slice %142 {offsets = [0, 96], sizes = [8, 32], strides = [1, 1]} : vector<8x128xf32> to vector<8x32xf32>
    %147 = arith.mulf %144, %112 : vector<8x32xf32>
    %148 = arith.mulf %143, %145 : vector<8x32xf32>
    %149 = arith.addf %147, %148 : vector<8x32xf32>
    %150 = math.tanh %149 : vector<8x32xf32>
    %151 = arith.mulf %146, %150 : vector<8x32xf32>
    %152 = vector.extract_strided_slice %39 {offsets = [24, 0], sizes = [8, 128], strides = [1, 1]} : vector<64x128xf32> to vector<8x128xf32>
    %153 = vector.extract_strided_slice %133 {offsets = [0, 0], sizes = [8, 128], strides = [1, 1]} : vector<16x384xf32> to vector<8x128xf32>
    %154 = arith.addf %152, %153 : vector<8x128xf32>
    %155 = arith.mulf %154, %8 : vector<8x128xf32>
    %156 = math.tanh %155 : vector<8x128xf32>
    %157 = arith.mulf %156, %8 : vector<8x128xf32>
    %158 = arith.addf %157, %11 : vector<8x128xf32>
    %159 = vector.extract_strided_slice %158 {offsets = [0, 0], sizes = [8, 32], strides = [1, 1]} : vector<8x128xf32> to vector<8x32xf32>
    %160 = vector.extract_strided_slice %158 {offsets = [0, 32], sizes = [8, 32], strides = [1, 1]} : vector<8x128xf32> to vector<8x32xf32>
    %161 = vector.extract_strided_slice %158 {offsets = [0, 64], sizes = [8, 32], strides = [1, 1]} : vector<8x128xf32> to vector<8x32xf32>
    %162 = vector.extract_strided_slice %158 {offsets = [0, 96], sizes = [8, 32], strides = [1, 1]} : vector<8x128xf32> to vector<8x32xf32>
    %163 = arith.mulf %160, %128 : vector<8x32xf32>
    %164 = arith.mulf %159, %161 : vector<8x32xf32>
    %165 = arith.addf %163, %164 : vector<8x32xf32>
    %166 = math.tanh %165 : vector<8x32xf32>
    %167 = arith.mulf %162, %166 : vector<8x32xf32>
    %168 = tpu.concatenate %167, %151 in 0 : vector<8x32xf32>, vector<8x32xf32> -> vector<16x32xf32>
    %169 = arith.truncf %168 : vector<16x32xf32> to vector<16x32xbf16>
    %cst_16 = arith.constant dense<0.000000e+00> : vector<16x384xf32>
    %170 = tpu.matmul %169, %40, %cst_16 {dimension_numbers = #tpu.dot_dimension_numbers<[1], [0], [0], [1], [0, 0, 1, 1], [], []>} : vector<16x32xbf16>, vector<32x384xbf16>, vector<16x384xf32> -> vector<16x384xf32>
    %171 = vector.extract_strided_slice %170 {offsets = [0, 128], sizes = [8, 128], strides = [1, 1]} : vector<16x384xf32> to vector<8x128xf32>
    %172 = vector.broadcast %41 : vector<1x128xf32> to vector<8x128xf32>
    %173 = arith.addf %172, %171 : vector<8x128xf32>
    %174 = vector.extract_strided_slice %170 {offsets = [8, 256], sizes = [8, 128], strides = [1, 1]} : vector<16x384xf32> to vector<8x128xf32>
    %175 = arith.addf %173, %174 : vector<8x128xf32>
    %176 = arith.mulf %175, %8 : vector<8x128xf32>
    %177 = math.tanh %176 : vector<8x128xf32>
    %178 = arith.mulf %177, %8 : vector<8x128xf32>
    %179 = arith.addf %178, %11 : vector<8x128xf32>
    %180 = vector.extract_strided_slice %179 {offsets = [0, 0], sizes = [8, 32], strides = [1, 1]} : vector<8x128xf32> to vector<8x32xf32>
    %181 = vector.extract_strided_slice %179 {offsets = [0, 32], sizes = [8, 32], strides = [1, 1]} : vector<8x128xf32> to vector<8x32xf32>
    %182 = vector.extract_strided_slice %179 {offsets = [0, 64], sizes = [8, 32], strides = [1, 1]} : vector<8x128xf32> to vector<8x32xf32>
    %183 = vector.extract_strided_slice %179 {offsets = [0, 96], sizes = [8, 32], strides = [1, 1]} : vector<8x128xf32> to vector<8x32xf32>
    %184 = arith.mulf %181, %149 : vector<8x32xf32>
    %185 = arith.mulf %180, %182 : vector<8x32xf32>
    %186 = arith.addf %184, %185 : vector<8x32xf32>
    %187 = math.tanh %186 : vector<8x32xf32>
    %188 = arith.mulf %183, %187 : vector<8x32xf32>
    %189 = vector.extract_strided_slice %39 {offsets = [32, 0], sizes = [8, 128], strides = [1, 1]} : vector<64x128xf32> to vector<8x128xf32>
    %190 = vector.extract_strided_slice %170 {offsets = [0, 0], sizes = [8, 128], strides = [1, 1]} : vector<16x384xf32> to vector<8x128xf32>
    %191 = arith.addf %189, %190 : vector<8x128xf32>
    %192 = arith.mulf %191, %8 : vector<8x128xf32>
    %193 = math.tanh %192 : vector<8x128xf32>
    %194 = arith.mulf %193, %8 : vector<8x128xf32>
    %195 = arith.addf %194, %11 : vector<8x128xf32>
    %196 = vector.extract_strided_slice %195 {offsets = [0, 0], sizes = [8, 32], strides = [1, 1]} : vector<8x128xf32> to vector<8x32xf32>
    %197 = vector.extract_strided_slice %195 {offsets = [0, 32], sizes = [8, 32], strides = [1, 1]} : vector<8x128xf32> to vector<8x32xf32>
    %198 = vector.extract_strided_slice %195 {offsets = [0, 64], sizes = [8, 32], strides = [1, 1]} : vector<8x128xf32> to vector<8x32xf32>
    %199 = vector.extract_strided_slice %195 {offsets = [0, 96], sizes = [8, 32], strides = [1, 1]} : vector<8x128xf32> to vector<8x32xf32>
    %200 = arith.mulf %197, %165 : vector<8x32xf32>
    %201 = arith.mulf %196, %198 : vector<8x32xf32>
    %202 = arith.addf %200, %201 : vector<8x32xf32>
    %203 = math.tanh %202 : vector<8x32xf32>
    %204 = arith.mulf %199, %203 : vector<8x32xf32>
    %205 = tpu.concatenate %204, %188 in 0 : vector<8x32xf32>, vector<8x32xf32> -> vector<16x32xf32>
    %206 = arith.truncf %205 : vector<16x32xf32> to vector<16x32xbf16>
    %cst_17 = arith.constant dense<0.000000e+00> : vector<16x384xf32>
    %207 = tpu.matmul %206, %40, %cst_17 {dimension_numbers = #tpu.dot_dimension_numbers<[1], [0], [0], [1], [0, 0, 1, 1], [], []>} : vector<16x32xbf16>, vector<32x384xbf16>, vector<16x384xf32> -> vector<16x384xf32>
    %208 = vector.extract_strided_slice %207 {offsets = [0, 128], sizes = [8, 128], strides = [1, 1]} : vector<16x384xf32> to vector<8x128xf32>
    %209 = vector.broadcast %41 : vector<1x128xf32> to vector<8x128xf32>
    %210 = arith.addf %209, %208 : vector<8x128xf32>
    %211 = vector.extract_strided_slice %207 {offsets = [8, 256], sizes = [8, 128], strides = [1, 1]} : vector<16x384xf32> to vector<8x128xf32>
    %212 = arith.addf %210, %211 : vector<8x128xf32>
    %213 = arith.mulf %212, %8 : vector<8x128xf32>
    %214 = math.tanh %213 : vector<8x128xf32>
    %215 = arith.mulf %214, %8 : vector<8x128xf32>
    %216 = arith.addf %215, %11 : vector<8x128xf32>
    %217 = vector.extract_strided_slice %216 {offsets = [0, 0], sizes = [8, 32], strides = [1, 1]} : vector<8x128xf32> to vector<8x32xf32>
    %218 = vector.extract_strided_slice %216 {offsets = [0, 32], sizes = [8, 32], strides = [1, 1]} : vector<8x128xf32> to vector<8x32xf32>
    %219 = vector.extract_strided_slice %216 {offsets = [0, 64], sizes = [8, 32], strides = [1, 1]} : vector<8x128xf32> to vector<8x32xf32>
    %220 = vector.extract_strided_slice %216 {offsets = [0, 96], sizes = [8, 32], strides = [1, 1]} : vector<8x128xf32> to vector<8x32xf32>
    %221 = arith.mulf %218, %186 : vector<8x32xf32>
    %222 = arith.mulf %217, %219 : vector<8x32xf32>
    %223 = arith.addf %221, %222 : vector<8x32xf32>
    %224 = math.tanh %223 : vector<8x32xf32>
    %225 = arith.mulf %220, %224 : vector<8x32xf32>
    %226 = vector.extract_strided_slice %39 {offsets = [40, 0], sizes = [8, 128], strides = [1, 1]} : vector<64x128xf32> to vector<8x128xf32>
    %227 = vector.extract_strided_slice %207 {offsets = [0, 0], sizes = [8, 128], strides = [1, 1]} : vector<16x384xf32> to vector<8x128xf32>
    %228 = arith.addf %226, %227 : vector<8x128xf32>
    %229 = arith.mulf %228, %8 : vector<8x128xf32>
    %230 = math.tanh %229 : vector<8x128xf32>
    %231 = arith.mulf %230, %8 : vector<8x128xf32>
    %232 = arith.addf %231, %11 : vector<8x128xf32>
    %233 = vector.extract_strided_slice %232 {offsets = [0, 0], sizes = [8, 32], strides = [1, 1]} : vector<8x128xf32> to vector<8x32xf32>
    %234 = vector.extract_strided_slice %232 {offsets = [0, 32], sizes = [8, 32], strides = [1, 1]} : vector<8x128xf32> to vector<8x32xf32>
    %235 = vector.extract_strided_slice %232 {offsets = [0, 64], sizes = [8, 32], strides = [1, 1]} : vector<8x128xf32> to vector<8x32xf32>
    %236 = vector.extract_strided_slice %232 {offsets = [0, 96], sizes = [8, 32], strides = [1, 1]} : vector<8x128xf32> to vector<8x32xf32>
    %237 = arith.mulf %234, %202 : vector<8x32xf32>
    %238 = arith.mulf %233, %235 : vector<8x32xf32>
    %239 = arith.addf %237, %238 : vector<8x32xf32>
    %240 = math.tanh %239 : vector<8x32xf32>
    %241 = arith.mulf %236, %240 : vector<8x32xf32>
    %242 = tpu.concatenate %241, %225 in 0 : vector<8x32xf32>, vector<8x32xf32> -> vector<16x32xf32>
    %243 = arith.truncf %242 : vector<16x32xf32> to vector<16x32xbf16>
    %cst_18 = arith.constant dense<0.000000e+00> : vector<16x384xf32>
    %244 = tpu.matmul %243, %40, %cst_18 {dimension_numbers = #tpu.dot_dimension_numbers<[1], [0], [0], [1], [0, 0, 1, 1], [], []>} : vector<16x32xbf16>, vector<32x384xbf16>, vector<16x384xf32> -> vector<16x384xf32>
    %245 = vector.extract_strided_slice %244 {offsets = [0, 128], sizes = [8, 128], strides = [1, 1]} : vector<16x384xf32> to vector<8x128xf32>
    %246 = vector.broadcast %41 : vector<1x128xf32> to vector<8x128xf32>
    %247 = arith.addf %246, %245 : vector<8x128xf32>
    %248 = vector.extract_strided_slice %244 {offsets = [8, 256], sizes = [8, 128], strides = [1, 1]} : vector<16x384xf32> to vector<8x128xf32>
    %249 = arith.addf %247, %248 : vector<8x128xf32>
    %250 = arith.mulf %249, %8 : vector<8x128xf32>
    %251 = math.tanh %250 : vector<8x128xf32>
    %252 = arith.mulf %251, %8 : vector<8x128xf32>
    %253 = arith.addf %252, %11 : vector<8x128xf32>
    %254 = vector.extract_strided_slice %253 {offsets = [0, 0], sizes = [8, 32], strides = [1, 1]} : vector<8x128xf32> to vector<8x32xf32>
    %255 = vector.extract_strided_slice %253 {offsets = [0, 32], sizes = [8, 32], strides = [1, 1]} : vector<8x128xf32> to vector<8x32xf32>
    %256 = vector.extract_strided_slice %253 {offsets = [0, 64], sizes = [8, 32], strides = [1, 1]} : vector<8x128xf32> to vector<8x32xf32>
    %257 = vector.extract_strided_slice %253 {offsets = [0, 96], sizes = [8, 32], strides = [1, 1]} : vector<8x128xf32> to vector<8x32xf32>
    %258 = arith.mulf %255, %223 : vector<8x32xf32>
    %259 = arith.mulf %254, %256 : vector<8x32xf32>
    %260 = arith.addf %258, %259 : vector<8x32xf32>
    %261 = math.tanh %260 : vector<8x32xf32>
    %262 = arith.mulf %257, %261 : vector<8x32xf32>
    %263 = vector.extract_strided_slice %39 {offsets = [48, 0], sizes = [8, 128], strides = [1, 1]} : vector<64x128xf32> to vector<8x128xf32>
    %264 = vector.extract_strided_slice %244 {offsets = [0, 0], sizes = [8, 128], strides = [1, 1]} : vector<16x384xf32> to vector<8x128xf32>
    %265 = arith.addf %263, %264 : vector<8x128xf32>
    %266 = arith.mulf %265, %8 : vector<8x128xf32>
    %267 = math.tanh %266 : vector<8x128xf32>
    %268 = arith.mulf %267, %8 : vector<8x128xf32>
    %269 = arith.addf %268, %11 : vector<8x128xf32>
    %270 = vector.extract_strided_slice %269 {offsets = [0, 0], sizes = [8, 32], strides = [1, 1]} : vector<8x128xf32> to vector<8x32xf32>
    %271 = vector.extract_strided_slice %269 {offsets = [0, 32], sizes = [8, 32], strides = [1, 1]} : vector<8x128xf32> to vector<8x32xf32>
    %272 = vector.extract_strided_slice %269 {offsets = [0, 64], sizes = [8, 32], strides = [1, 1]} : vector<8x128xf32> to vector<8x32xf32>
    %273 = vector.extract_strided_slice %269 {offsets = [0, 96], sizes = [8, 32], strides = [1, 1]} : vector<8x128xf32> to vector<8x32xf32>
    %274 = arith.mulf %271, %239 : vector<8x32xf32>
    %275 = arith.mulf %270, %272 : vector<8x32xf32>
    %276 = arith.addf %274, %275 : vector<8x32xf32>
    %277 = math.tanh %276 : vector<8x32xf32>
    %278 = arith.mulf %273, %277 : vector<8x32xf32>
    %279 = tpu.concatenate %278, %262 in 0 : vector<8x32xf32>, vector<8x32xf32> -> vector<16x32xf32>
    %280 = arith.truncf %279 : vector<16x32xf32> to vector<16x32xbf16>
    %cst_19 = arith.constant dense<0.000000e+00> : vector<16x384xf32>
    %281 = tpu.matmul %280, %40, %cst_19 {dimension_numbers = #tpu.dot_dimension_numbers<[1], [0], [0], [1], [0, 0, 1, 1], [], []>} : vector<16x32xbf16>, vector<32x384xbf16>, vector<16x384xf32> -> vector<16x384xf32>
    %282 = vector.extract_strided_slice %281 {offsets = [0, 128], sizes = [8, 128], strides = [1, 1]} : vector<16x384xf32> to vector<8x128xf32>
    %283 = vector.broadcast %41 : vector<1x128xf32> to vector<8x128xf32>
    %284 = arith.addf %283, %282 : vector<8x128xf32>
    %285 = vector.extract_strided_slice %281 {offsets = [8, 256], sizes = [8, 128], strides = [1, 1]} : vector<16x384xf32> to vector<8x128xf32>
    %286 = arith.addf %284, %285 : vector<8x128xf32>
    %287 = arith.mulf %286, %8 : vector<8x128xf32>
    %288 = math.tanh %287 : vector<8x128xf32>
    %289 = arith.mulf %288, %8 : vector<8x128xf32>
    %290 = arith.addf %289, %11 : vector<8x128xf32>
    %291 = vector.extract_strided_slice %290 {offsets = [0, 0], sizes = [8, 32], strides = [1, 1]} : vector<8x128xf32> to vector<8x32xf32>
    %292 = vector.extract_strided_slice %290 {offsets = [0, 32], sizes = [8, 32], strides = [1, 1]} : vector<8x128xf32> to vector<8x32xf32>
    %293 = vector.extract_strided_slice %290 {offsets = [0, 64], sizes = [8, 32], strides = [1, 1]} : vector<8x128xf32> to vector<8x32xf32>
    %294 = vector.extract_strided_slice %290 {offsets = [0, 96], sizes = [8, 32], strides = [1, 1]} : vector<8x128xf32> to vector<8x32xf32>
    %295 = arith.mulf %292, %260 : vector<8x32xf32>
    %296 = arith.mulf %291, %293 : vector<8x32xf32>
    %297 = arith.addf %295, %296 : vector<8x32xf32>
    %298 = math.tanh %297 : vector<8x32xf32>
    %299 = arith.mulf %294, %298 : vector<8x32xf32>
    %300 = vector.extract_strided_slice %39 {offsets = [56, 0], sizes = [8, 128], strides = [1, 1]} : vector<64x128xf32> to vector<8x128xf32>
    %301 = vector.extract_strided_slice %281 {offsets = [0, 0], sizes = [8, 128], strides = [1, 1]} : vector<16x384xf32> to vector<8x128xf32>
    %302 = arith.addf %300, %301 : vector<8x128xf32>
    %303 = arith.mulf %302, %8 : vector<8x128xf32>
    %304 = math.tanh %303 : vector<8x128xf32>
    %305 = arith.mulf %304, %8 : vector<8x128xf32>
    %306 = arith.addf %305, %11 : vector<8x128xf32>
    %307 = vector.extract_strided_slice %306 {offsets = [0, 0], sizes = [8, 32], strides = [1, 1]} : vector<8x128xf32> to vector<8x32xf32>
    %308 = vector.extract_strided_slice %306 {offsets = [0, 32], sizes = [8, 32], strides = [1, 1]} : vector<8x128xf32> to vector<8x32xf32>
    %309 = vector.extract_strided_slice %306 {offsets = [0, 64], sizes = [8, 32], strides = [1, 1]} : vector<8x128xf32> to vector<8x32xf32>
    %310 = vector.extract_strided_slice %306 {offsets = [0, 96], sizes = [8, 32], strides = [1, 1]} : vector<8x128xf32> to vector<8x32xf32>
    %311 = arith.mulf %308, %276 : vector<8x32xf32>
    %312 = arith.mulf %307, %309 : vector<8x32xf32>
    %313 = arith.addf %311, %312 : vector<8x32xf32>
    %314 = math.tanh %313 : vector<8x32xf32>
    %315 = arith.mulf %310, %314 : vector<8x32xf32>
    %316 = tpu.concatenate %315, %299 in 0 : vector<8x32xf32>, vector<8x32xf32> -> vector<16x32xf32>
    %317 = arith.truncf %316 : vector<16x32xf32> to vector<16x32xbf16>
    %cst_20 = arith.constant dense<0.000000e+00> : vector<16x384xf32>
    %318 = tpu.matmul %317, %40, %cst_20 {dimension_numbers = #tpu.dot_dimension_numbers<[1], [0], [0], [1], [0, 0, 1, 1], [], []>} : vector<16x32xbf16>, vector<32x384xbf16>, vector<16x384xf32> -> vector<16x384xf32>
    %319 = vector.extract_strided_slice %318 {offsets = [0, 128], sizes = [8, 128], strides = [1, 1]} : vector<16x384xf32> to vector<8x128xf32>
    %320 = vector.broadcast %41 : vector<1x128xf32> to vector<8x128xf32>
    %321 = arith.addf %320, %319 : vector<8x128xf32>
    %322 = vector.extract_strided_slice %318 {offsets = [8, 256], sizes = [8, 128], strides = [1, 1]} : vector<16x384xf32> to vector<8x128xf32>
    %323 = arith.addf %321, %322 : vector<8x128xf32>
    %324 = arith.mulf %323, %8 : vector<8x128xf32>
    %325 = math.tanh %324 : vector<8x128xf32>
    %326 = arith.mulf %325, %8 : vector<8x128xf32>
    %327 = arith.addf %326, %11 : vector<8x128xf32>
    %328 = vector.extract_strided_slice %327 {offsets = [0, 0], sizes = [8, 32], strides = [1, 1]} : vector<8x128xf32> to vector<8x32xf32>
    %329 = vector.extract_strided_slice %327 {offsets = [0, 32], sizes = [8, 32], strides = [1, 1]} : vector<8x128xf32> to vector<8x32xf32>
    %330 = vector.extract_strided_slice %327 {offsets = [0, 64], sizes = [8, 32], strides = [1, 1]} : vector<8x128xf32> to vector<8x32xf32>
    %331 = vector.extract_strided_slice %327 {offsets = [0, 96], sizes = [8, 32], strides = [1, 1]} : vector<8x128xf32> to vector<8x32xf32>
    %332 = arith.mulf %329, %297 : vector<8x32xf32>
    %333 = arith.mulf %328, %330 : vector<8x32xf32>
    %334 = arith.addf %332, %333 : vector<8x32xf32>
    %335 = math.tanh %334 : vector<8x32xf32>
    %336 = arith.mulf %331, %335 : vector<8x32xf32>
    %c0_21 = arith.constant 0 : index
    %c0_22 = arith.constant 0 : index
    %337 = vector.load %arg5[%c0_21, %c0_22] : memref<1x32xf32, #tpu.memory_space<vmem>>, vector<1x32xf32>
    %338 = vector.broadcast %337 : vector<1x32xf32> to vector<8x32xf32>
    %339 = arith.mulf %336, %338 : vector<8x32xf32>
    %cst_23 = arith.constant dense<0.000000e+00> : vector<8xf32>
    %340 = vector.multi_reduction <add>, %339, %cst_23 [1] : vector<8x32xf32> to vector<8xf32>
    %341 = vector.shape_cast %340 : vector<8xf32> to vector<8x1xf32>
    %c0_24 = arith.constant 0 : index
    %c0_25 = arith.constant 0 : index
    %342 = vector.load %arg6[%c0_24, %c0_25] : memref<1x1xf32, #tpu.memory_space<vmem>>, vector<1x1xf32>
    %343 = vector.broadcast %342 : vector<1x1xf32> to vector<8x1xf32>
    %344 = arith.addf %341, %343 : vector<8x1xf32>
    %c0_26 = arith.constant 0 : index
    %c0_27 = arith.constant 0 : index
    %345 = vector.load %arg7[%c0_26, %c0_27] : memref<8x1xf32, #tpu.memory_space<vmem>>, vector<8x1xf32>
    tpu.vector_store %arg7[%c0_26, %c0_27], %344 {strides = array<i32>} : memref<8x1xf32, #tpu.memory_space<vmem>>, vector<8x1xf32>,
    return
  }
}

</mosaic_0001>

<llo_original>
// kernel: lstm_model_forward.1
$region0: #{lstm_model_forward.1}
  #allocation0 [shape = 'u32[]', space=smem, size = 0x4, offset = 0x4, fixed_abs, tag = 'smem constant byte address 0x4 - core index']
  #allocation1 [shape = 'u32[144,128]{1,0:T(1,128)}', space=vmem, size = 0x12000, scoped, tag = 'internal scratch']
  #allocation2 [shape = 'f32[1,1]{1,0:T(1,128)S(1)}', space=vmem, size = 0x200, scoped, tag = 'scoped memory for lstm_model_forward.1']
  %s0 = inlined_call_operand.vmem [shape: f32[64,4], index: 0, kind: input, shape index: {}]
  %s1 = inlined_call_operand.vmem [shape: f32[4,128], index: 1, kind: input, shape index: {}]
  %s2 = inlined_call_operand.vmem [shape: f32[1,128], index: 2, kind: input, shape index: {}]
  %s3 = inlined_call_operand.vmem [shape: bf16[32,384], index: 3, kind: input, shape index: {}]
  %s4 = inlined_call_operand.vmem [shape: f32[1,128], index: 4, kind: input, shape index: {}]
  %s5 = inlined_call_operand.vmem [shape: f32[1,32], index: 5, kind: input, shape index: {}]
  %s6 = inlined_call_operand.<no memory space> [shape: f32[1,1], index: 6, kind: input, shape index: {}]
  %s7 = inlined_call_operand.vmem [shape: f32[8,1], index: 7, kind: output, shape index: {}]
  %s8 = sld [smem:[#allocation0]]
  $region38: #{lstm_model_forward.1} parent=0
    _
  %s10 = ssub.s32 1, %s8
  %s11 = scalar_select 0, %s10, %s8
  %v12 = vstv %s6
  %13 = vst [vmem:[#allocation2] sm:$0x1] %v12
  // Predicated region
  $region2: #{lstm_model_forward.1} parent=0 // pred_check
    _
  $region3: #{lstm_model_forward.1} parent=0 // pred_check_branch
    %15 = sbr.rel (0) target = $region5
  $region4: #{lstm_model_forward.1} parent=0 // pred_region
    _
  $region5: #{lstm_model_forward.1} parent=0 // pred_fallthru
    _
  // Predicated region
  $region6: #{lstm_model_forward.1} parent=0 // pred_check
    _
  $region7: #{lstm_model_forward.1} parent=0 // pred_check_branch
    %17 = sbr.rel (0) target = $region9
  $region8: #{lstm_model_forward.1} parent=0 // pred_region
    _
  $region9: #{lstm_model_forward.1} parent=0 // pred_fallthru
    _
  // Predicated region
  $region10: #{lstm_model_forward.1} parent=0 // pred_check
    _
  $region11: #{lstm_model_forward.1} parent=0 // pred_check_branch
    %19 = sbr.rel (0) target = $region13
  $region12: #{lstm_model_forward.1} parent=0 // pred_region
    _
  $region13: #{lstm_model_forward.1} parent=0 // pred_fallthru
    _
  // Predicated region
  $region14: #{lstm_model_forward.1} parent=0 // pred_check
    _
  $region15: #{lstm_model_forward.1} parent=0 // pred_check_branch
    %21 = sbr.rel (0) target = $region17
  $region16: #{lstm_model_forward.1} parent=0 // pred_region
    _
  $region17: #{lstm_model_forward.1} parent=0 // pred_fallthru
    _
  // Predicated region
  $region18: #{lstm_model_forward.1} parent=0 // pred_check
    _
  $region19: #{lstm_model_forward.1} parent=0 // pred_check_branch
    %23 = sbr.rel (0) target = $region21
  $region20: #{lstm_model_forward.1} parent=0 // pred_region
    _
  $region21: #{lstm_model_forward.1} parent=0 // pred_fallthru
    _
  // Predicated region
  $region22: #{lstm_model_forward.1} parent=0 // pred_check
    _
  $region23: #{lstm_model_forward.1} parent=0 // pred_check_branch
    %25 = sbr.rel (0) target = $region25
  $region24: #{lstm_model_forward.1} parent=0 // pred_region
    _
  $region25: #{lstm_model_forward.1} parent=0 // pred_fallthru
    _
  // Predicated region
  $region26: #{lstm_model_forward.1} parent=0 // pred_check
    _
  $region27: #{lstm_model_forward.1} parent=0 // pred_check_branch
    %27 = sbr.rel (0) target = $region29
  $region28: #{lstm_model_forward.1} parent=0 // pred_region
    _
  $region29: #{lstm_model_forward.1} parent=0 // pred_fallthru
    _
  %v29 = vlaneseq
  %v30 = vand.u32 %v29, 127
  %vm31 = vcmp.ge.s32.totalorder %v30, 64
  %vm32 = vcmp.lt.s32.totalorder %v30, 96
  %vm33 = vmand %vm31, %vm32
  %v34 = vsel %vm33, 1.0, 0.5
  %v35 = vsel %vm33, 0.0, 0.5
  %v36 = vld [vmem:[%s0] sm:$0xff]
  %v37 = vld [vmem:[%s0 + $0x8] sm:$0xff]
  %v38 = vld [vmem:[%s0 + $0x10] sm:$0xff]
  %v39 = vld [vmem:[%s0 + $0x18] sm:$0xff]
  %v40 = vld [vmem:[%s0 + $0x20] sm:$0xff]
  %v41 = vld [vmem:[%s0 + $0x28] sm:$0xff]
  %v42 = vld [vmem:[%s0 + $0x30] sm:$0xff]
  %v43 = vld [vmem:[%s0 + $0x38] sm:$0xff]
  %v44 = vld [vmem:[%s1] sm:$0xf]
  %46 = vset.pattern.permute.xlu0 0
  %47 = vperm.xlu0 %46, %v36
  %v48 = vpop.permute.xlu0 %47
  %51 = vset.pattern.permute.xlu0 0
  %52 = vperm.xlu0 %51, %v37
  %v53 = vpop.permute.xlu0 %52
  %56 = vset.pattern.permute.xlu0 0
  %57 = vperm.xlu0 %56, %v38
  %v58 = vpop.permute.xlu0 %57
  %61 = vset.pattern.permute.xlu0 0
  %62 = vperm.xlu0 %61, %v39
  %v63 = vpop.permute.xlu0 %62
  %66 = vset.pattern.permute.xlu0 0
  %67 = vperm.xlu0 %66, %v40
  %v68 = vpop.permute.xlu0 %67
  %71 = vset.pattern.permute.xlu0 0
  %72 = vperm.xlu0 %71, %v41
  %v73 = vpop.permute.xlu0 %72
  %76 = vset.pattern.permute.xlu0 0
  %77 = vperm.xlu0 %76, %v42
  %v78 = vpop.permute.xlu0 %77
  %81 = vset.pattern.permute.xlu0 0
  %82 = vperm.xlu0 %81, %v43
  %v83 = vpop.permute.xlu0 %82
  %v85 = vlaneseq
  %v86 = vshrl.u32 %v85, 7
  %v87 = vsub.s32 0, %v86
  %v88 = vrot.slane %v44, %v87
  %v89 = vmul.f32 %v48, %v88
  %v90 = vmul.f32 %v53, %v88
  %v91 = vmul.f32 %v58, %v88
  %v92 = vmul.f32 %v63, %v88
  %v93 = vmul.f32 %v68, %v88
  %v94 = vmul.f32 %v73, %v88
  %v95 = vmul.f32 %v78, %v88
  %v96 = vmul.f32 %v83, %v88
  %v97 = vld [vmem:[%s2] sm:$0x1]
  %v99 = vlaneseq
  %v100 = vshrl.u32 %v99, 7
  %v101 = vsub.s32 0, %v100
  %v102 = vrot.slane %v97, %v101
  %v104 = vadd.f32 %v89, %v102
  %v105 = vadd.f32 %v90, %v102
  %v106 = vadd.f32 %v91, %v102
  %v107 = vadd.f32 %v92, %v102
  %v108 = vadd.f32 %v93, %v102
  %v109 = vadd.f32 %v94, %v102
  %v110 = vadd.f32 %v95, %v102
  %v111 = vadd.f32 %v96, %v102
  %112 = vset.pattern.permute.xlu0 1
  %113 = vperm.xlu0 %112, %v36
  %v114 = vpop.permute.xlu0 %113
  %116 = vset.pattern.permute.xlu0 1
  %117 = vperm.xlu0 %116, %v37
  %v118 = vpop.permute.xlu0 %117
  %120 = vset.pattern.permute.xlu0 1
  %121 = vperm.xlu0 %120, %v38
  %v122 = vpop.permute.xlu0 %121
  %124 = vset.pattern.permute.xlu0 1
  %125 = vperm.xlu0 %124, %v39
  %v126 = vpop.permute.xlu0 %125
  %128 = vset.pattern.permute.xlu0 1
  %129 = vperm.xlu0 %128, %v40
  %v130 = vpop.permute.xlu0 %129
  %132 = vset.pattern.permute.xlu0 1
  %133 = vperm.xlu0 %132, %v41
  %v134 = vpop.permute.xlu0 %133
  %136 = vset.pattern.permute.xlu0 1
  %137 = vperm.xlu0 %136, %v42
  %v138 = vpop.permute.xlu0 %137
  %140 = vset.pattern.permute.xlu0 1
  %141 = vperm.xlu0 %140, %v43
  %v142 = vpop.permute.xlu0 %141
  %v144 = vlaneseq
  %v145 = vshrl.u32 %v144, 7
  %v146 = vsub.s32 1, %v145
  %v147 = vrot.slane %v44, %v146
  %v148 = vmul.f32 %v114, %v147
  %v149 = vmul.f32 %v118, %v147
  %v150 = vmul.f32 %v122, %v147
  %v151 = vmul.f32 %v126, %v147
  %v152 = vmul.f32 %v130, %v147
  %v153 = vmul.f32 %v134, %v147
  %v154 = vmul.f32 %v138, %v147
  %v155 = vmul.f32 %v142, %v147
  %v156 = vadd.f32 %v104, %v148
  %v157 = vadd.f32 %v105, %v149
  %v158 = vadd.f32 %v106, %v150
  %v159 = vadd.f32 %v107, %v151
  %v160 = vadd.f32 %v108, %v152
  %v161 = vadd.f32 %v109, %v153
  %v162 = vadd.f32 %v110, %v154
  %v163 = vadd.f32 %v111, %v155
  %164 = vset.pattern.permute.xlu0 2
  %165 = vperm.xlu0 %164, %v36
  %v166 = vpop.permute.xlu0 %165
  %168 = vset.pattern.permute.xlu0 2
  %169 = vperm.xlu0 %168, %v37
  %v170 = vpop.permute.xlu0 %169
  %172 = vset.pattern.permute.xlu0 2
  %173 = vperm.xlu0 %172, %v38
  %v174 = vpop.permute.xlu0 %173
  %176 = vset.pattern.permute.xlu0 2
  %177 = vperm.xlu0 %176, %v39
  %v178 = vpop.permute.xlu0 %177
  %180 = vset.pattern.permute.xlu0 2
  %181 = vperm.xlu0 %180, %v40
  %v182 = vpop.permute.xlu0 %181
  %184 = vset.pattern.permute.xlu0 2
  %185 = vperm.xlu0 %184, %v41
  %v186 = vpop.permute.xlu0 %185
  %188 = vset.pattern.permute.xlu0 2
  %189 = vperm.xlu0 %188, %v42
  %v190 = vpop.permute.xlu0 %189
  %192 = vset.pattern.permute.xlu0 2
  %193 = vperm.xlu0 %192, %v43
  %v194 = vpop.permute.xlu0 %193
  %v196 = vlaneseq
  %v197 = vshrl.u32 %v196, 7
  %v198 = vsub.s32 2, %v197
  %v199 = vrot.slane %v44, %v198
  %v200 = vmul.f32 %v166, %v199
  %v201 = vmul.f32 %v170, %v199
  %v202 = vmul.f32 %v174, %v199
  %v203 = vmul.f32 %v178, %v199
  %v204 = vmul.f32 %v182, %v199
  %v205 = vmul.f32 %v186, %v199
  %v206 = vmul.f32 %v190, %v199
  %v207 = vmul.f32 %v194, %v199
  %v208 = vadd.f32 %v156, %v200
  %v209 = vadd.f32 %v157, %v201
  %v210 = vadd.f32 %v158, %v202
  %v211 = vadd.f32 %v159, %v203
  %v212 = vadd.f32 %v160, %v204
  %v213 = vadd.f32 %v161, %v205
  %v214 = vadd.f32 %v162, %v206
  %v215 = vadd.f32 %v163, %v207
  %216 = vset.pattern.permute.xlu0 3
  %217 = vperm.xlu0 %216, %v36
  %v218 = vpop.permute.xlu0 %217
  %220 = vset.pattern.permute.xlu0 3
  %221 = vperm.xlu0 %220, %v37
  %v222 = vpop.permute.xlu0 %221
  %224 = vset.pattern.permute.xlu0 3
  %225 = vperm.xlu0 %224, %v38
  %v226 = vpop.permute.xlu0 %225
  %228 = vset.pattern.permute.xlu0 3
  %229 = vperm.xlu0 %228, %v39
  %v230 = vpop.permute.xlu0 %229
  %232 = vset.pattern.permute.xlu0 3
  %233 = vperm.xlu0 %232, %v40
  %v234 = vpop.permute.xlu0 %233
  %236 = vset.pattern.permute.xlu0 3
  %237 = vperm.xlu0 %236, %v41
  %v238 = vpop.permute.xlu0 %237
  %240 = vset.pattern.permute.xlu0 3
  %241 = vperm.xlu0 %240, %v42
  %v242 = vpop.permute.xlu0 %241
  %244 = vset.pattern.permute.xlu0 3
  %245 = vperm.xlu0 %244, %v43
  %v246 = vpop.permute.xlu0 %245
  %v248 = vlaneseq
  %v249 = vshrl.u32 %v248, 7
  %v250 = vsub.s32 3, %v249
  %v251 = vrot.slane %v44, %v250
  %v252 = vmul.f32 %v218, %v251
  %v253 = vmul.f32 %v222, %v251
  %v254 = vmul.f32 %v226, %v251
  %v255 = vmul.f32 %v230, %v251
  %v256 = vmul.f32 %v234, %v251
  %v257 = vmul.f32 %v238, %v251
  %v258 = vmul.f32 %v242, %v251
  %v259 = vmul.f32 %v246, %v251
  %v260 = vadd.f32 %v208, %v252
  %v261 = vadd.f32 %v209, %v253
  %v262 = vadd.f32 %v210, %v254
  %v263 = vadd.f32 %v211, %v255
  %v264 = vadd.f32 %v212, %v256
  %v265 = vadd.f32 %v213, %v257
  %v266 = vadd.f32 %v214, %v258
  %v267 = vadd.f32 %v215, %v259
  %v268 = vld [vmem:[%s3] sm:$0xff]
  %v269 = vld [vmem:[%s3 + $0x8] sm:$0xf]
  %v270 = vld [vmem:[%s3 + $0xc] sm:$0xff]
  %v271 = vld [vmem:[%s3 + $0x14] sm:$0xf]
  %v272 = vld [vmem:[%s3 + $0x18] sm:$0xff]
  %v273 = vld [vmem:[%s3 + $0x20] sm:$0xf]
  %v274 = vld [vmem:[%s3 + $0x24] sm:$0xff]
  %v275 = vld [vmem:[%s3 + $0x2c] sm:$0xf]
  %v276 = vld [vmem:[%s4] sm:$0x1]
  %v277 = vmul.f32 %v260, %v34
  %v278 = vtanh.pop %v277
  %v279 = vmul.f32 %v278, %v34
  %v280 = vadd.f32 %v279, %v35
  %v281 = vmul.f32 %v280, 0.0
  %283 = vrot.lane.b32.xlu0 %v280, 64
  %v284 = vpop.permute.xlu0 %283
  %v286 = vmul.f32 %v280, %v284
  %288 = vrot.lane.b32.xlu0 %v286, 32
  %v289 = vpop.permute.xlu0 %288
  %v291 = vadd.f32 %v281, %v289
  %v292 = vtanh.pop %v291
  %294 = vrot.lane.b32.xlu0 %v292, 64
  %v295 = vpop.permute.xlu0 %294
  %v297 = vmul.f32 %v280, %v295
  %v298 = vpack.c.bf16 0.0, %v297
  %300 = vrot.lane.b32.xlu0 %v298, 32
  %v301 = vpop.permute.xlu0 %300
  %v310 = vunpack.c.l.b16 %v268
  %v311 = vunpack.c.h.b16 %v268
  %v312 = vunpack.c.l.b16 %v269
  %v313 = vunpack.c.l.b16 %v270
  %v314 = vunpack.c.h.b16 %v270
  %v315 = vunpack.c.l.b16 %v271
  %v316 = vunpack.c.l.b16 %v272
  %v317 = vunpack.c.h.b16 %v272
  %v318 = vunpack.c.l.b16 %v273
  %v319 = vunpack.c.l.b16 %v274
  %v320 = vunpack.c.h.b16 %v274
  %v321 = vunpack.c.l.b16 %v275
  %v322 = vpack.c.b16 %v313, %v310
  %v323 = vpack.c.b16 %v314, %v311
  %v324 = vpack.c.b16 %v315, %v312
  %v325 = vpack.c.b16 %v319, %v316
  %v326 = vpack.c.b16 %v320, %v317
  %v327 = vpack.c.b16 %v321, %v318
  %vm334 = vcmask 261120
  %v336 = vsel %vm334, %v301, 0
  %338 = vmatprep.subr.bf16.mxu0 %v323
  %339 = vmatpush1.bf16.msra.mxu0 %v322
  %340 = vmatprep.subr.bf16.mxu0 %v326
  %341 = vmatpush1.bf16.msra.mxu0 %v325
  %342 = vmatprep.subr.bf16.mxu0 0
  %343 = vmatpush1.bf16.msra.mxu0 0
  %344 = vmatprep.subr.bf16.mxu0 0
  %345 = vmatpush1.bf16.msra.mxu0 0
  %346 = vmatprep.subr.bf16.mxu0 0
  %347 = vmatpush1.bf16.msra.mxu0 0
  %348 = vmatprep.subr.bf16.mxu0 0
  %349 = vmatpush1.bf16.msra.mxu0 0
  %350 = vmatprep.subr.bf16.mxu0 0
  %351 = vmatpush1.bf16.msra.mxu0 0
  %352 = vmatprep.subr.bf16.mxu0 0
  %353 = vmatpush1.bf16.msra.mxu0 0
  %354 = vmatprep.subr.bf16.mxu0 0
  %355 = vmatpush1.bf16.msra.mxu0 0
  %356 = vmatprep.subr.bf16.mxu0 0
  %357 = vmatpush1.bf16.msra.mxu0 0
  %358 = vmatprep.subr.bf16.mxu0 0
  %359 = vmatpush1.bf16.msra.mxu0 0
  %360 = vmatprep.subr.bf16.mxu0 0
  %361 = vmatpush1.bf16.msra.mxu0 0
  %362 = vmatprep.subr.bf16.mxu0 0
  %363 = vmatpush1.bf16.msra.mxu0 0
  %364 = vmatprep.subr.bf16.mxu0 0
  %365 = vmatpush1.bf16.msra.mxu0 0
  %366 = vmatprep.subr.bf16.mxu0 0
  %367 = vmatpush1.bf16.msra.mxu0 0
  %368 = vmatprep.subr.bf16.mxu0 0
  %369 = vmatpush1.bf16.msra.mxu0 0
  %370 = vmatprep.mubr.bf16.mxu0 0
  %371 = vmatmul.mubr.bf16.gmra.mrb[0].mxu0 %v336
  %v372 = vpop.f32.mrb[0].mxu0
  %v373 = vadd.f32 0.0, %v372
  %v374 = vpop.f32.mrb[0].mxu0
  %v375 = vadd.f32 0.0, %v374
  %v376 = vpop.f32.mrb[0].mxu0
  %v377 = vpop.f32.mrb[0].mxu0
  %378 = vdwg.mxu0
  %379 = vmatprep.subr.bf16.mxu0 0
  %380 = vmatpush1.bf16.msra.mxu0 %v324
  %381 = vmatprep.subr.bf16.mxu0 0
  %382 = vmatpush1.bf16.msra.mxu0 %v327
  %383 = vmatprep.subr.bf16.mxu0 0
  %384 = vmatpush1.bf16.msra.mxu0 0
  %385 = vmatprep.subr.bf16.mxu0 0
  %386 = vmatpush1.bf16.msra.mxu0 0
  %387 = vmatprep.subr.bf16.mxu0 0
  %388 = vmatpush1.bf16.msra.mxu0 0
  %389 = vmatprep.subr.bf16.mxu0 0
  %390 = vmatpush1.bf16.msra.mxu0 0
  %391 = vmatprep.subr.bf16.mxu0 0
  %392 = vmatpush1.bf16.msra.mxu0 0
  %393 = vmatprep.subr.bf16.mxu0 0
  %394 = vmatpush1.bf16.msra.mxu0 0
  %395 = vmatprep.subr.bf16.mxu0 0
  %396 = vmatpush1.bf16.msra.mxu0 0
  %397 = vmatprep.subr.bf16.mxu0 0
  %398 = vmatpush1.bf16.msra.mxu0 0
  %399 = vmatprep.subr.bf16.mxu0 0
  %400 = vmatpush1.bf16.msra.mxu0 0
  %401 = vmatprep.subr.bf16.mxu0 0
  %402 = vmatpush1.bf16.msra.mxu0 0
  %403 = vmatprep.subr.bf16.mxu0 0
  %404 = vmatpush1.bf16.msra.mxu0 0
  %405 = vmatprep.subr.bf16.mxu0 0
  %406 = vmatpush1.bf16.msra.mxu0 0
  %407 = vmatprep.subr.bf16.mxu0 0
  %408 = vmatpush1.bf16.msra.mxu0 0
  %409 = vmatprep.subr.bf16.mxu0 0
  %410 = vmatpush1.bf16.msra.mxu0 0
  %411 = vmatprep.mubr.bf16.mxu0 0
  %412 = vmatmul.mubr.bf16.gmra.mrb[0].mxu0 %v336
  %v413 = vpop.f32.mrb[0].mxu0
  %v414 = vpop.f32.mrb[0].mxu0
  %v415 = vpop.f32.mrb[0].mxu0
  %v416 = vadd.f32 0.0, %v415
  %v417 = vpop.f32.mrb[0].mxu0
  %418 = vdwg.mxu0
  %v420 = vlaneseq
  %v421 = vshrl.u32 %v420, 7
  %v422 = vsub.s32 0, %v421
  %v423 = vrot.slane %v276, %v422
  %v425 = vadd.f32 %v423, %v375
  %v426 = vadd.f32 %v425, %v416
  %v427 = vmul.f32 %v426, %v34
  %v428 = vtanh.pop %v427
  %v429 = vmul.f32 %v428, %v34
  %v430 = vadd.f32 %v429, %v35
  %v431 = vmul.f32 %v430, 0.0
  %433 = vrot.lane.b32.xlu0 %v430, 64
  %v434 = vpop.permute.xlu0 %433
  %v436 = vmul.f32 %v430, %v434
  %438 = vrot.lane.b32.xlu0 %v436, 32
  %v439 = vpop.permute.xlu0 %438
  %v441 = vadd.f32 %v431, %v439
  %v442 = vtanh.pop %v441
  %444 = vrot.lane.b32.xlu0 %v442, 64
  %v445 = vpop.permute.xlu0 %444
  %v447 = vmul.f32 %v430, %v445
  %v448 = vadd.f32 %v261, %v373
  %v449 = vmul.f32 %v448, %v34
  %v450 = vtanh.pop %v449
  %v451 = vmul.f32 %v450, %v34
  %v452 = vadd.f32 %v451, %v35
  %v453 = vmul.f32 %v452, %v291
  %455 = vrot.lane.b32.xlu0 %v452, 64
  %v456 = vpop.permute.xlu0 %455
  %v458 = vmul.f32 %v452, %v456
  %460 = vrot.lane.b32.xlu0 %v458, 32
  %v461 = vpop.permute.xlu0 %460
  %v463 = vadd.f32 %v453, %v461
  %v464 = vtanh.pop %v463
  %466 = vrot.lane.b32.xlu0 %v464, 64
  %v467 = vpop.permute.xlu0 %466
  %v469 = vmul.f32 %v452, %v467
  %v470 = vpack.c.bf16 %v447, %v469
  %472 = vrot.lane.b32.xlu0 %v470, 32
  %v473 = vpop.permute.xlu0 %472
  %v475 = vsel %vm334, %v473, 0
  %477 = vmatprep.subr.bf16.mxu0 %v323
  %478 = vmatpush1.bf16.msra.mxu0 %v322
  %479 = vmatprep.subr.bf16.mxu0 %v326
  %480 = vmatpush1.bf16.msra.mxu0 %v325
  %481 = vmatprep.subr.bf16.mxu0 0
  %482 = vmatpush1.bf16.msra.mxu0 0
  %483 = vmatprep.subr.bf16.mxu0 0
  %484 = vmatpush1.bf16.msra.mxu0 0
  %485 = vmatprep.subr.bf16.mxu0 0
  %486 = vmatpush1.bf16.msra.mxu0 0
  %487 = vmatprep.subr.bf16.mxu0 0
  %488 = vmatpush1.bf16.msra.mxu0 0
  %489 = vmatprep.subr.bf16.mxu0 0
  %490 = vmatpush1.bf16.msra.mxu0 0
  %491 = vmatprep.subr.bf16.mxu0 0
  %492 = vmatpush1.bf16.msra.mxu0 0
  %493 = vmatprep.subr.bf16.mxu0 0
  %494 = vmatpush1.bf16.msra.mxu0 0
  %495 = vmatprep.subr.bf16.mxu0 0
  %496 = vmatpush1.bf16.msra.mxu0 0
  %497 = vmatprep.subr.bf16.mxu0 0
  %498 = vmatpush1.bf16.msra.mxu0 0
  %499 = vmatprep.subr.bf16.mxu0 0
  %500 = vmatpush1.bf16.msra.mxu0 0
  %501 = vmatprep.subr.bf16.mxu0 0
  %502 = vmatpush1.bf16.msra.mxu0 0
  %503 = vmatprep.subr.bf16.mxu0 0
  %504 = vmatpush1.bf16.msra.mxu0 0
  %505 = vmatprep.subr.bf16.mxu0 0
  %506 = vmatpush1.bf16.msra.mxu0 0
  %507 = vmatprep.subr.bf16.mxu0 0
  %508 = vmatpush1.bf16.msra.mxu0 0
  %509 = vmatprep.mubr.bf16.mxu0 0
  %510 = vmatmul.mubr.bf16.gmra.mrb[0].mxu0 %v475
  %v511 = vpop.f32.mrb[0].mxu0
  %v512 = vadd.f32 0.0, %v511
  %v513 = vpop.f32.mrb[0].mxu0
  %v514 = vadd.f32 0.0, %v513
  %v515 = vpop.f32.mrb[0].mxu0
  %v516 = vpop.f32.mrb[0].mxu0
  %517 = vdwg.mxu0
  %518 = vmatprep.subr.bf16.mxu0 0
  %519 = vmatpush1.bf16.msra.mxu0 %v324
  %520 = vmatprep.subr.bf16.mxu0 0
  %521 = vmatpush1.bf16.msra.mxu0 %v327
  %522 = vmatprep.subr.bf16.mxu0 0
  %523 = vmatpush1.bf16.msra.mxu0 0
  %524 = vmatprep.subr.bf16.mxu0 0
  %525 = vmatpush1.bf16.msra.mxu0 0
  %526 = vmatprep.subr.bf16.mxu0 0
  %527 = vmatpush1.bf16.msra.mxu0 0
  %528 = vmatprep.subr.bf16.mxu0 0
  %529 = vmatpush1.bf16.msra.mxu0 0
  %530 = vmatprep.subr.bf16.mxu0 0
  %531 = vmatpush1.bf16.msra.mxu0 0
  %532 = vmatprep.subr.bf16.mxu0 0
  %533 = vmatpush1.bf16.msra.mxu0 0
  %534 = vmatprep.subr.bf16.mxu0 0
  %535 = vmatpush1.bf16.msra.mxu0 0
  %536 = vmatprep.subr.bf16.mxu0 0
  %537 = vmatpush1.bf16.msra.mxu0 0
  %538 = vmatprep.subr.bf16.mxu0 0
  %539 = vmatpush1.bf16.msra.mxu0 0
  %540 = vmatprep.subr.bf16.mxu0 0
  %541 = vmatpush1.bf16.msra.mxu0 0
  %542 = vmatprep.subr.bf16.mxu0 0
  %543 = vmatpush1.bf16.msra.mxu0 0
  %544 = vmatprep.subr.bf16.mxu0 0
  %545 = vmatpush1.bf16.msra.mxu0 0
  %546 = vmatprep.subr.bf16.mxu0 0
  %547 = vmatpush1.bf16.msra.mxu0 0
  %548 = vmatprep.subr.bf16.mxu0 0
  %549 = vmatpush1.bf16.msra.mxu0 0
  %550 = vmatprep.mubr.bf16.mxu0 0
  %551 = vmatmul.mubr.bf16.gmra.mrb[0].mxu0 %v475
  %v552 = vpop.f32.mrb[0].mxu0
  %v553 = vpop.f32.mrb[0].mxu0
  %v554 = vpop.f32.mrb[0].mxu0
  %v555 = vadd.f32 0.0, %v554
  %v556 = vpop.f32.mrb[0].mxu0
  %557 = vdwg.mxu0
  %v558 = vadd.f32 %v423, %v514
  %v559 = vadd.f32 %v558, %v555
  %v560 = vmul.f32 %v559, %v34
  %v561 = vtanh.pop %v560
  %v562 = vmul.f32 %v561, %v34
  %v563 = vadd.f32 %v562, %v35
  %v564 = vmul.f32 %v563, %v441
  %566 = vrot.lane.b32.xlu0 %v563, 64
  %v567 = vpop.permute.xlu0 %566
  %v569 = vmul.f32 %v563, %v567
  %571 = vrot.lane.b32.xlu0 %v569, 32
  %v572 = vpop.permute.xlu0 %571
  %v574 = vadd.f32 %v564, %v572
  %v575 = vtanh.pop %v574
  %577 = vrot.lane.b32.xlu0 %v575, 64
  %v578 = vpop.permute.xlu0 %577
  %v580 = vmul.f32 %v563, %v578
  %v581 = vadd.f32 %v262, %v512
  %v582 = vmul.f32 %v581, %v34
  %v583 = vtanh.pop %v582
  %v584 = vmul.f32 %v583, %v34
  %v585 = vadd.f32 %v584, %v35
  %v586 = vmul.f32 %v585, %v463
  %588 = vrot.lane.b32.xlu0 %v585, 64
  %v589 = vpop.permute.xlu0 %588
  %v591 = vmul.f32 %v585, %v589
  %593 = vrot.lane.b32.xlu0 %v591, 32
  %v594 = vpop.permute.xlu0 %593
  %v596 = vadd.f32 %v586, %v594
  %v597 = vtanh.pop %v596
  %599 = vrot.lane.b32.xlu0 %v597, 64
  %v600 = vpop.permute.xlu0 %599
  %v602 = vmul.f32 %v585, %v600
  %v603 = vpack.c.bf16 %v580, %v602
  %605 = vrot.lane.b32.xlu0 %v603, 32
  %v606 = vpop.permute.xlu0 %605
  %v608 = vsel %vm334, %v606, 0
  %610 = vmatprep.subr.bf16.mxu0 %v323
  %611 = vmatpush1.bf16.msra.mxu0 %v322
  %612 = vmatprep.subr.bf16.mxu0 %v326
  %613 = vmatpush1.bf16.msra.mxu0 %v325
  %614 = vmatprep.subr.bf16.mxu0 0
  %615 = vmatpush1.bf16.msra.mxu0 0
  %616 = vmatprep.subr.bf16.mxu0 0
  %617 = vmatpush1.bf16.msra.mxu0 0
  %618 = vmatprep.subr.bf16.mxu0 0
  %619 = vmatpush1.bf16.msra.mxu0 0
  %620 = vmatprep.subr.bf16.mxu0 0
  %621 = vmatpush1.bf16.msra.mxu0 0
  %622 = vmatprep.subr.bf16.mxu0 0
  %623 = vmatpush1.bf16.msra.mxu0 0
  %624 = vmatprep.subr.bf16.mxu0 0
  %625 = vmatpush1.bf16.msra.mxu0 0
  %626 = vmatprep.subr.bf16.mxu0 0
  %627 = vmatpush1.bf16.msra.mxu0 0
  %628 = vmatprep.subr.bf16.mxu0 0
  %629 = vmatpush1.bf16.msra.mxu0 0
  %630 = vmatprep.subr.bf16.mxu0 0
  %631 = vmatpush1.bf16.msra.mxu0 0
  %632 = vmatprep.subr.bf16.mxu0 0
  %633 = vmatpush1.bf16.msra.mxu0 0
  %634 = vmatprep.subr.bf16.mxu0 0
  %635 = vmatpush1.bf16.msra.mxu0 0
  %636 = vmatprep.subr.bf16.mxu0 0
  %637 = vmatpush1.bf16.msra.mxu0 0
  %638 = vmatprep.subr.bf16.mxu0 0
  %639 = vmatpush1.bf16.msra.mxu0 0
  %640 = vmatprep.subr.bf16.mxu0 0
  %641 = vmatpush1.bf16.msra.mxu0 0
  %642 = vmatprep.mubr.bf16.mxu0 0
  %643 = vmatmul.mubr.bf16.gmra.mrb[0].mxu0 %v608
  %v644 = vpop.f32.mrb[0].mxu0
  %v645 = vadd.f32 0.0, %v644
  %v646 = vpop.f32.mrb[0].mxu0
  %v647 = vadd.f32 0.0, %v646
  %v648 = vpop.f32.mrb[0].mxu0
  %v649 = vpop.f32.mrb[0].mxu0
  %650 = vdwg.mxu0
  %651 = vmatprep.subr.bf16.mxu0 0
  %652 = vmatpush1.bf16.msra.mxu0 %v324
  %653 = vmatprep.subr.bf16.mxu0 0
  %654 = vmatpush1.bf16.msra.mxu0 %v327
  %655 = vmatprep.subr.bf16.mxu0 0
  %656 = vmatpush1.bf16.msra.mxu0 0
  %657 = vmatprep.subr.bf16.mxu0 0
  %658 = vmatpush1.bf16.msra.mxu0 0
  %659 = vmatprep.subr.bf16.mxu0 0
  %660 = vmatpush1.bf16.msra.mxu0 0
  %661 = vmatprep.subr.bf16.mxu0 0
  %662 = vmatpush1.bf16.msra.mxu0 0
  %663 = vmatprep.subr.bf16.mxu0 0
  %664 = vmatpush1.bf16.msra.mxu0 0
  %665 = vmatprep.subr.bf16.mxu0 0
  %666 = vmatpush1.bf16.msra.mxu0 0
  %667 = vmatprep.subr.bf16.mxu0 0
  %668 = vmatpush1.bf16.msra.mxu0 0
  %669 = vmatprep.subr.bf16.mxu0 0
  %670 = vmatpush1.bf16.msra.mxu0 0
  %671 = vmatprep.subr.bf16.mxu0 0
  %672 = vmatpush1.bf16.msra.mxu0 0
  %673 = vmatprep.subr.bf16.mxu0 0
  %674 = vmatpush1.bf16.msra.mxu0 0
  %675 = vmatprep.subr.bf16.mxu0 0
  %676 = vmatpush1.bf16.msra.mxu0 0
  %677 = vmatprep.subr.bf16.mxu0 0
  %678 = vmatpush1.bf16.msra.mxu0 0
  %679 = vmatprep.subr.bf16.mxu0 0
  %680 = vmatpush1.bf16.msra.mxu0 0
  %681 = vmatprep.subr.bf16.mxu0 0
  %682 = vmatpush1.bf16.msra.mxu0 0
  %683 = vmatprep.mubr.bf16.mxu0 0
  %684 = vmatmul.mubr.bf16.gmra.mrb[0].mxu0 %v608
  %v685 = vpop.f32.mrb[0].mxu0
  %v686 = vpop.f32.mrb[0].mxu0
  %v687 = vpop.f32.mrb[0].mxu0
  %v688 = vadd.f32 0.0, %v687
  %v689 = vpop.f32.mrb[0].mxu0
  %690 = vdwg.mxu0
  %v691 = vadd.f32 %v423, %v647
  %v692 = vadd.f32 %v691, %v688
  %v693 = vmul.f32 %v692, %v34
  %v694 = vtanh.pop %v693
  %v695 = vmul.f32 %v694, %v34
  %v696 = vadd.f32 %v695, %v35
  %v697 = vmul.f32 %v696, %v574
  %699 = vrot.lane.b32.xlu0 %v696, 64
  %v700 = vpop.permute.xlu0 %699
  %v702 = vmul.f32 %v696, %v700
  %704 = vrot.lane.b32.xlu0 %v702, 32
  %v705 = vpop.permute.xlu0 %704
  %v707 = vadd.f32 %v697, %v705
  %v708 = vtanh.pop %v707
  %710 = vrot.lane.b32.xlu0 %v708, 64
  %v711 = vpop.permute.xlu0 %710
  %v713 = vmul.f32 %v696, %v711
  %v714 = vadd.f32 %v263, %v645
  %v715 = vmul.f32 %v714, %v34
  %v716 = vtanh.pop %v715
  %v717 = vmul.f32 %v716, %v34
  %v718 = vadd.f32 %v717, %v35
  %v719 = vmul.f32 %v718, %v596
  %721 = vrot.lane.b32.xlu0 %v718, 64
  %v722 = vpop.permute.xlu0 %721
  %v724 = vmul.f32 %v718, %v722
  %726 = vrot.lane.b32.xlu0 %v724, 32
  %v727 = vpop.permute.xlu0 %726
  %v729 = vadd.f32 %v719, %v727
  %v730 = vtanh.pop %v729
  %732 = vrot.lane.b32.xlu0 %v730, 64
  %v733 = vpop.permute.xlu0 %732
  %v735 = vmul.f32 %v718, %v733
  %v736 = vpack.c.bf16 %v713, %v735
  %738 = vrot.lane.b32.xlu0 %v736, 32
  %v739 = vpop.permute.xlu0 %738
  %v741 = vsel %vm334, %v739, 0
  %743 = vmatprep.subr.bf16.mxu0 %v323
  %744 = vmatpush1.bf16.msra.mxu0 %v322
  %745 = vmatprep.subr.bf16.mxu0 %v326
  %746 = vmatpush1.bf16.msra.mxu0 %v325
  %747 = vmatprep.subr.bf16.mxu0 0
  %748 = vmatpush1.bf16.msra.mxu0 0
  %749 = vmatprep.subr.bf16.mxu0 0
  %750 = vmatpush1.bf16.msra.mxu0 0
  %751 = vmatprep.subr.bf16.mxu0 0
  %752 = vmatpush1.bf16.msra.mxu0 0
  %753 = vmatprep.subr.bf16.mxu0 0
  %754 = vmatpush1.bf16.msra.mxu0 0
  %755 = vmatprep.subr.bf16.mxu0 0
  %756 = vmatpush1.bf16.msra.mxu0 0
  %757 = vmatprep.subr.bf16.mxu0 0
  %758 = vmatpush1.bf16.msra.mxu0 0
  %759 = vmatprep.subr.bf16.mxu0 0
  %760 = vmatpush1.bf16.msra.mxu0 0
  %761 = vmatprep.subr.bf16.mxu0 0
  %762 = vmatpush1.bf16.msra.mxu0 0
  %763 = vmatprep.subr.bf16.mxu0 0
  %764 = vmatpush1.bf16.msra.mxu0 0
  %765 = vmatprep.subr.bf16.mxu0 0
  %766 = vmatpush1.bf16.msra.mxu0 0
  %767 = vmatprep.subr.bf16.mxu0 0
  %768 = vmatpush1.bf16.msra.mxu0 0
  %769 = vmatprep.subr.bf16.mxu0 0
  %770 = vmatpush1.bf16.msra.mxu0 0
  %771 = vmatprep.subr.bf16.mxu0 0
  %772 = vmatpush1.bf16.msra.mxu0 0
  %773 = vmatprep.subr.bf16.mxu0 0
  %774 = vmatpush1.bf16.msra.mxu0 0
  %775 = vmatprep.mubr.bf16.mxu0 0
  %776 = vmatmul.mubr.bf16.gmra.mrb[0].mxu0 %v741
  %v777 = vpop.f32.mrb[0].mxu0
  %v778 = vadd.f32 0.0, %v777
  %v779 = vpop.f32.mrb[0].mxu0
  %v780 = vadd.f32 0.0, %v779
  %v781 = vpop.f32.mrb[0].mxu0
  %v782 = vpop.f32.mrb[0].mxu0
  %783 = vdwg.mxu0
  %784 = vmatprep.subr.bf16.mxu0 0
  %785 = vmatpush1.bf16.msra.mxu0 %v324
  %786 = vmatprep.subr.bf16.mxu0 0
  %787 = vmatpush1.bf16.msra.mxu0 %v327
  %788 = vmatprep.subr.bf16.mxu0 0
  %789 = vmatpush1.bf16.msra.mxu0 0
  %790 = vmatprep.subr.bf16.mxu0 0
  %791 = vmatpush1.bf16.msra.mxu0 0
  %792 = vmatprep.subr.bf16.mxu0 0
  %793 = vmatpush1.bf16.msra.mxu0 0
  %794 = vmatprep.subr.bf16.mxu0 0
  %795 = vmatpush1.bf16.msra.mxu0 0
  %796 = vmatprep.subr.bf16.mxu0 0
  %797 = vmatpush1.bf16.msra.mxu0 0
  %798 = vmatprep.subr.bf16.mxu0 0
  %799 = vmatpush1.bf16.msra.mxu0 0
  %800 = vmatprep.subr.bf16.mxu0 0
  %801 = vmatpush1.bf16.msra.mxu0 0
  %802 = vmatprep.subr.bf16.mxu0 0
  %803 = vmatpush1.bf16.msra.mxu0 0
  %804 = vmatprep.subr.bf16.mxu0 0
  %805 = vmatpush1.bf16.msra.mxu0 0
  %806 = vmatprep.subr.bf16.mxu0 0
  %807 = vmatpush1.bf16.msra.mxu0 0
  %808 = vmatprep.subr.bf16.mxu0 0
  %809 = vmatpush1.bf16.msra.mxu0 0
  %810 = vmatprep.subr.bf16.mxu0 0
  %811 = vmatpush1.bf16.msra.mxu0 0
  %812 = vmatprep.subr.bf16.mxu0 0
  %813 = vmatpush1.bf16.msra.mxu0 0
  %814 = vmatprep.subr.bf16.mxu0 0
  %815 = vmatpush1.bf16.msra.mxu0 0
  %816 = vmatprep.mubr.bf16.mxu0 0
  %817 = vmatmul.mubr.bf16.gmra.mrb[0].mxu0 %v741
  %v818 = vpop.f32.mrb[0].mxu0
  %v819 = vpop.f32.mrb[0].mxu0
  %v820 = vpop.f32.mrb[0].mxu0
  %v821 = vadd.f32 0.0, %v820
  %v822 = vpop.f32.mrb[0].mxu0
  %823 = vdwg.mxu0
  %v824 = vadd.f32 %v423, %v780
  %v825 = vadd.f32 %v824, %v821
  %v826 = vmul.f32 %v825, %v34
  %v827 = vtanh.pop %v826
  %v828 = vmul.f32 %v827, %v34
  %v829 = vadd.f32 %v828, %v35
  %v830 = vmul.f32 %v829, %v707
  %832 = vrot.lane.b32.xlu0 %v829, 64
  %v833 = vpop.permute.xlu0 %832
  %v835 = vmul.f32 %v829, %v833
  %837 = vrot.lane.b32.xlu0 %v835, 32
  %v838 = vpop.permute.xlu0 %837
  %v840 = vadd.f32 %v830, %v838
  %v841 = vtanh.pop %v840
  %843 = vrot.lane.b32.xlu0 %v841, 64
  %v844 = vpop.permute.xlu0 %843
  %v846 = vmul.f32 %v829, %v844
  %v847 = vadd.f32 %v264, %v778
  %v848 = vmul.f32 %v847, %v34
  %v849 = vtanh.pop %v848
  %v850 = vmul.f32 %v849, %v34
  %v851 = vadd.f32 %v850, %v35
  %v852 = vmul.f32 %v851, %v729
  %854 = vrot.lane.b32.xlu0 %v851, 64
  %v855 = vpop.permute.xlu0 %854
  %v857 = vmul.f32 %v851, %v855
  %859 = vrot.lane.b32.xlu0 %v857, 32
  %v860 = vpop.permute.xlu0 %859
  %v862 = vadd.f32 %v852, %v860
  %v863 = vtanh.pop %v862
  %865 = vrot.lane.b32.xlu0 %v863, 64
  %v866 = vpop.permute.xlu0 %865
  %v868 = vmul.f32 %v851, %v866
  %v869 = vpack.c.bf16 %v846, %v868
  %871 = vrot.lane.b32.xlu0 %v869, 32
  %v872 = vpop.permute.xlu0 %871
  %v874 = vsel %vm334, %v872, 0
  %876 = vmatprep.subr.bf16.mxu0 %v323
  %877 = vmatpush1.bf16.msra.mxu0 %v322
  %878 = vmatprep.subr.bf16.mxu0 %v326
  %879 = vmatpush1.bf16.msra.mxu0 %v325
  %880 = vmatprep.subr.bf16.mxu0 0
  %881 = vmatpush1.bf16.msra.mxu0 0
  %882 = vmatprep.subr.bf16.mxu0 0
  %883 = vmatpush1.bf16.msra.mxu0 0
  %884 = vmatprep.subr.bf16.mxu0 0
  %885 = vmatpush1.bf16.msra.mxu0 0
  %886 = vmatprep.subr.bf16.mxu0 0
  %887 = vmatpush1.bf16.msra.mxu0 0
  %888 = vmatprep.subr.bf16.mxu0 0
  %889 = vmatpush1.bf16.msra.mxu0 0
  %890 = vmatprep.subr.bf16.mxu0 0
  %891 = vmatpush1.bf16.msra.mxu0 0
  %892 = vmatprep.subr.bf16.mxu0 0
  %893 = vmatpush1.bf16.msra.mxu0 0
  %894 = vmatprep.subr.bf16.mxu0 0
  %895 = vmatpush1.bf16.msra.mxu0 0
  %896 = vmatprep.subr.bf16.mxu0 0
  %897 = vmatpush1.bf16.msra.mxu0 0
  %898 = vmatprep.subr.bf16.mxu0 0
  %899 = vmatpush1.bf16.msra.mxu0 0
  %900 = vmatprep.subr.bf16.mxu0 0
  %901 = vmatpush1.bf16.msra.mxu0 0
  %902 = vmatprep.subr.bf16.mxu0 0
  %903 = vmatpush1.bf16.msra.mxu0 0
  %904 = vmatprep.subr.bf16.mxu0 0
  %905 = vmatpush1.bf16.msra.mxu0 0
  %906 = vmatprep.subr.bf16.mxu0 0
  %907 = vmatpush1.bf16.msra.mxu0 0
  %908 = vmatprep.mubr.bf16.mxu0 0
  %909 = vmatmul.mubr.bf16.gmra.mrb[0].mxu0 %v874
  %v910 = vpop.f32.mrb[0].mxu0
  %v911 = vadd.f32 0.0, %v910
  %v912 = vpop.f32.mrb[0].mxu0
  %v913 = vadd.f32 0.0, %v912
  %v914 = vpop.f32.mrb[0].mxu0
  %v915 = vpop.f32.mrb[0].mxu0
  %916 = vdwg.mxu0
  %917 = vmatprep.subr.bf16.mxu0 0
  %918 = vmatpush1.bf16.msra.mxu0 %v324
  %919 = vmatprep.subr.bf16.mxu0 0
  %920 = vmatpush1.bf16.msra.mxu0 %v327
  %921 = vmatprep.subr.bf16.mxu0 0
  %922 = vmatpush1.bf16.msra.mxu0 0
  %923 = vmatprep.subr.bf16.mxu0 0
  %924 = vmatpush1.bf16.msra.mxu0 0
  %925 = vmatprep.subr.bf16.mxu0 0
  %926 = vmatpush1.bf16.msra.mxu0 0
  %927 = vmatprep.subr.bf16.mxu0 0
  %928 = vmatpush1.bf16.msra.mxu0 0
  %929 = vmatprep.subr.bf16.mxu0 0
  %930 = vmatpush1.bf16.msra.mxu0 0
  %931 = vmatprep.subr.bf16.mxu0 0
  %932 = vmatpush1.bf16.msra.mxu0 0
  %933 = vmatprep.subr.bf16.mxu0 0
  %934 = vmatpush1.bf16.msra.mxu0 0
  %935 = vmatprep.subr.bf16.mxu0 0
  %936 = vmatpush1.bf16.msra.mxu0 0
  %937 = vmatprep.subr.bf16.mxu0 0
  %938 = vmatpush1.bf16.msra.mxu0 0
  %939 = vmatprep.subr.bf16.mxu0 0
  %940 = vmatpush1.bf16.msra.mxu0 0
  %941 = vmatprep.subr.bf16.mxu0 0
  %942 = vmatpush1.bf16.msra.mxu0 0
  %943 = vmatprep.subr.bf16.mxu0 0
  %944 = vmatpush1.bf16.msra.mxu0 0
  %945 = vmatprep.subr.bf16.mxu0 0
  %946 = vmatpush1.bf16.msra.mxu0 0
  %947 = vmatprep.subr.bf16.mxu0 0
  %948 = vmatpush1.bf16.msra.mxu0 0
  %949 = vmatprep.mubr.bf16.mxu0 0
  %950 = vmatmul.mubr.bf16.gmra.mrb[0].mxu0 %v874
  %v951 = vpop.f32.mrb[0].mxu0
  %v952 = vpop.f32.mrb[0].mxu0
  %v953 = vpop.f32.mrb[0].mxu0
  %v954 = vadd.f32 0.0, %v953
  %v955 = vpop.f32.mrb[0].mxu0
  %956 = vdwg.mxu0
  %v957 = vadd.f32 %v423, %v913
  %v958 = vadd.f32 %v957, %v954
  %v959 = vmul.f32 %v958, %v34
  %v960 = vtanh.pop %v959
  %v961 = vmul.f32 %v960, %v34
  %v962 = vadd.f32 %v961, %v35
  %v963 = vmul.f32 %v962, %v840
  %965 = vrot.lane.b32.xlu0 %v962, 64
  %v966 = vpop.permute.xlu0 %965
  %v968 = vmul.f32 %v962, %v966
  %970 = vrot.lane.b32.xlu0 %v968, 32
  %v971 = vpop.permute.xlu0 %970
  %v973 = vadd.f32 %v963, %v971
  %v974 = vtanh.pop %v973
  %976 = vrot.lane.b32.xlu0 %v974, 64
  %v977 = vpop.permute.xlu0 %976
  %v979 = vmul.f32 %v962, %v977
  %v980 = vadd.f32 %v265, %v911
  %v981 = vmul.f32 %v980, %v34
  %v982 = vtanh.pop %v981
  %v983 = vmul.f32 %v982, %v34
  %v984 = vadd.f32 %v983, %v35
  %v985 = vmul.f32 %v984, %v862
  %987 = vrot.lane.b32.xlu0 %v984, 64
  %v988 = vpop.permute.xlu0 %987
  %v990 = vmul.f32 %v984, %v988
  %992 = vrot.lane.b32.xlu0 %v990, 32
  %v993 = vpop.permute.xlu0 %992
  %v995 = vadd.f32 %v985, %v993
  %v996 = vtanh.pop %v995
  %998 = vrot.lane.b32.xlu0 %v996, 64
  %v999 = vpop.permute.xlu0 %998
  %v1001 = vmul.f32 %v984, %v999
  %v1002 = vpack.c.bf16 %v979, %v1001
  %1004 = vrot.lane.b32.xlu0 %v1002, 32
  %v1005 = vpop.permute.xlu0 %1004
  %v1007 = vsel %vm334, %v1005, 0
  %1009 = vmatprep.subr.bf16.mxu0 %v323
  %1010 = vmatpush1.bf16.msra.mxu0 %v322
  %1011 = vmatprep.subr.bf16.mxu0 %v326
  %1012 = vmatpush1.bf16.msra.mxu0 %v325
  %1013 = vmatprep.subr.bf16.mxu0 0
  %1014 = vmatpush1.bf16.msra.mxu0 0
  %1015 = vmatprep.subr.bf16.mxu0 0
  %1016 = vmatpush1.bf16.msra.mxu0 0
  %1017 = vmatprep.subr.bf16.mxu0 0
  %1018 = vmatpush1.bf16.msra.mxu0 0
  %1019 = vmatprep.subr.bf16.mxu0 0
  %1020 = vmatpush1.bf16.msra.mxu0 0
  %1021 = vmatprep.subr.bf16.mxu0 0
  %1022 = vmatpush1.bf16.msra.mxu0 0
  %1023 = vmatprep.subr.bf16.mxu0 0
  %1024 = vmatpush1.bf16.msra.mxu0 0
  %1025 = vmatprep.subr.bf16.mxu0 0
  %1026 = vmatpush1.bf16.msra.mxu0 0
  %1027 = vmatprep.subr.bf16.mxu0 0
  %1028 = vmatpush1.bf16.msra.mxu0 0
  %1029 = vmatprep.subr.bf16.mxu0 0
  %1030 = vmatpush1.bf16.msra.mxu0 0
  %1031 = vmatprep.subr.bf16.mxu0 0
  %1032 = vmatpush1.bf16.msra.mxu0 0
  %1033 = vmatprep.subr.bf16.mxu0 0
  %1034 = vmatpush1.bf16.msra.mxu0 0
  %1035 = vmatprep.subr.bf16.mxu0 0
  %1036 = vmatpush1.bf16.msra.mxu0 0
  %1037 = vmatprep.subr.bf16.mxu0 0
  %1038 = vmatpush1.bf16.msra.mxu0 0
  %1039 = vmatprep.subr.bf16.mxu0 0
  %1040 = vmatpush1.bf16.msra.mxu0 0
  %1041 = vmatprep.mubr.bf16.mxu0 0
  %1042 = vmatmul.mubr.bf16.gmra.mrb[0].mxu0 %v1007
  %v1043 = vpop.f32.mrb[0].mxu0
  %v1044 = vadd.f32 0.0, %v1043
  %v1045 = vpop.f32.mrb[0].mxu0
  %v1046 = vadd.f32 0.0, %v1045
  %v1047 = vpop.f32.mrb[0].mxu0
  %v1048 = vpop.f32.mrb[0].mxu0
  %1049 = vdwg.mxu0
  %1050 = vmatprep.subr.bf16.mxu0 0
  %1051 = vmatpush1.bf16.msra.mxu0 %v324
  %1052 = vmatprep.subr.bf16.mxu0 0
  %1053 = vmatpush1.bf16.msra.mxu0 %v327
  %1054 = vmatprep.subr.bf16.mxu0 0
  %1055 = vmatpush1.bf16.msra.mxu0 0
  %1056 = vmatprep.subr.bf16.mxu0 0
  %1057 = vmatpush1.bf16.msra.mxu0 0
  %1058 = vmatprep.subr.bf16.mxu0 0
  %1059 = vmatpush1.bf16.msra.mxu0 0
  %1060 = vmatprep.subr.bf16.mxu0 0
  %1061 = vmatpush1.bf16.msra.mxu0 0
  %1062 = vmatprep.subr.bf16.mxu0 0
  %1063 = vmatpush1.bf16.msra.mxu0 0
  %1064 = vmatprep.subr.bf16.mxu0 0
  %1065 = vmatpush1.bf16.msra.mxu0 0
  %1066 = vmatprep.subr.bf16.mxu0 0
  %1067 = vmatpush1.bf16.msra.mxu0 0
  %1068 = vmatprep.subr.bf16.mxu0 0
  %1069 = vmatpush1.bf16.msra.mxu0 0
  %1070 = vmatprep.subr.bf16.mxu0 0
  %1071 = vmatpush1.bf16.msra.mxu0 0
  %1072 = vmatprep.subr.bf16.mxu0 0
  %1073 = vmatpush1.bf16.msra.mxu0 0
  %1074 = vmatprep.subr.bf16.mxu0 0
  %1075 = vmatpush1.bf16.msra.mxu0 0
  %1076 = vmatprep.subr.bf16.mxu0 0
  %1077 = vmatpush1.bf16.msra.mxu0 0
  %1078 = vmatprep.subr.bf16.mxu0 0
  %1079 = vmatpush1.bf16.msra.mxu0 0
  %1080 = vmatprep.subr.bf16.mxu0 0
  %1081 = vmatpush1.bf16.msra.mxu0 0
  %1082 = vmatprep.mubr.bf16.mxu0 0
  %1083 = vmatmul.mubr.bf16.gmra.mrb[0].mxu0 %v1007
  %v1084 = vpop.f32.mrb[0].mxu0
  %v1085 = vpop.f32.mrb[0].mxu0
  %v1086 = vpop.f32.mrb[0].mxu0
  %v1087 = vadd.f32 0.0, %v1086
  %v1088 = vpop.f32.mrb[0].mxu0
  %1089 = vdwg.mxu0
  %v1090 = vadd.f32 %v423, %v1046
  %v1091 = vadd.f32 %v1090, %v1087
  %v1092 = vmul.f32 %v1091, %v34
  %v1093 = vtanh.pop %v1092
  %v1094 = vmul.f32 %v1093, %v34
  %v1095 = vadd.f32 %v1094, %v35
  %v1096 = vmul.f32 %v1095, %v973
  %1098 = vrot.lane.b32.xlu0 %v1095, 64
  %v1099 = vpop.permute.xlu0 %1098
  %v1101 = vmul.f32 %v1095, %v1099
  %1103 = vrot.lane.b32.xlu0 %v1101, 32
  %v1104 = vpop.permute.xlu0 %1103
  %v1106 = vadd.f32 %v1096, %v1104
  %v1107 = vtanh.pop %v1106
  %1109 = vrot.lane.b32.xlu0 %v1107, 64
  %v1110 = vpop.permute.xlu0 %1109
  %v1112 = vmul.f32 %v1095, %v1110
  %v1113 = vadd.f32 %v266, %v1044
  %v1114 = vmul.f32 %v1113, %v34
  %v1115 = vtanh.pop %v1114
  %v1116 = vmul.f32 %v1115, %v34
  %v1117 = vadd.f32 %v1116, %v35
  %v1118 = vmul.f32 %v1117, %v995
  %1120 = vrot.lane.b32.xlu0 %v1117, 64
  %v1121 = vpop.permute.xlu0 %1120
  %v1123 = vmul.f32 %v1117, %v1121
  %1125 = vrot.lane.b32.xlu0 %v1123, 32
  %v1126 = vpop.permute.xlu0 %1125
  %v1128 = vadd.f32 %v1118, %v1126
  %v1129 = vtanh.pop %v1128
  %1131 = vrot.lane.b32.xlu0 %v1129, 64
  %v1132 = vpop.permute.xlu0 %1131
  %v1134 = vmul.f32 %v1117, %v1132
  %v1135 = vpack.c.bf16 %v1112, %v1134
  %1137 = vrot.lane.b32.xlu0 %v1135, 32
  %v1138 = vpop.permute.xlu0 %1137
  %v1140 = vsel %vm334, %v1138, 0
  %1142 = vmatprep.subr.bf16.mxu0 %v323
  %1143 = vmatpush1.bf16.msra.mxu0 %v322
  %1144 = vmatprep.subr.bf16.mxu0 %v326
  %1145 = vmatpush1.bf16.msra.mxu0 %v325
  %1146 = vmatprep.subr.bf16.mxu0 0
  %1147 = vmatpush1.bf16.msra.mxu0 0
  %1148 = vmatprep.subr.bf16.mxu0 0
  %1149 = vmatpush1.bf16.msra.mxu0 0
  %1150 = vmatprep.subr.bf16.mxu0 0
  %1151 = vmatpush1.bf16.msra.mxu0 0
  %1152 = vmatprep.subr.bf16.mxu0 0
  %1153 = vmatpush1.bf16.msra.mxu0 0
  %1154 = vmatprep.subr.bf16.mxu0 0
  %1155 = vmatpush1.bf16.msra.mxu0 0
  %1156 = vmatprep.subr.bf16.mxu0 0
  %1157 = vmatpush1.bf16.msra.mxu0 0
  %1158 = vmatprep.subr.bf16.mxu0 0
  %1159 = vmatpush1.bf16.msra.mxu0 0
  %1160 = vmatprep.subr.bf16.mxu0 0
  %1161 = vmatpush1.bf16.msra.mxu0 0
  %1162 = vmatprep.subr.bf16.mxu0 0
  %1163 = vmatpush1.bf16.msra.mxu0 0
  %1164 = vmatprep.subr.bf16.mxu0 0
  %1165 = vmatpush1.bf16.msra.mxu0 0
  %1166 = vmatprep.subr.bf16.mxu0 0
  %1167 = vmatpush1.bf16.msra.mxu0 0
  %1168 = vmatprep.subr.bf16.mxu0 0
  %1169 = vmatpush1.bf16.msra.mxu0 0
  %1170 = vmatprep.subr.bf16.mxu0 0
  %1171 = vmatpush1.bf16.msra.mxu0 0
  %1172 = vmatprep.subr.bf16.mxu0 0
  %1173 = vmatpush1.bf16.msra.mxu0 0
  %1174 = vmatprep.mubr.bf16.mxu0 0
  %1175 = vmatmul.mubr.bf16.gmra.mrb[0].mxu0 %v1140
  %v1176 = vpop.f32.mrb[0].mxu0
  %v1177 = vadd.f32 0.0, %v1176
  %v1178 = vpop.f32.mrb[0].mxu0
  %v1179 = vadd.f32 0.0, %v1178
  %v1180 = vpop.f32.mrb[0].mxu0
  %v1181 = vpop.f32.mrb[0].mxu0
  %1182 = vdwg.mxu0
  %1183 = vmatprep.subr.bf16.mxu0 0
  %1184 = vmatpush1.bf16.msra.mxu0 %v324
  %1185 = vmatprep.subr.bf16.mxu0 0
  %1186 = vmatpush1.bf16.msra.mxu0 %v327
  %1187 = vmatprep.subr.bf16.mxu0 0
  %1188 = vmatpush1.bf16.msra.mxu0 0
  %1189 = vmatprep.subr.bf16.mxu0 0
  %1190 = vmatpush1.bf16.msra.mxu0 0
  %1191 = vmatprep.subr.bf16.mxu0 0
  %1192 = vmatpush1.bf16.msra.mxu0 0
  %1193 = vmatprep.subr.bf16.mxu0 0
  %1194 = vmatpush1.bf16.msra.mxu0 0
  %1195 = vmatprep.subr.bf16.mxu0 0
  %1196 = vmatpush1.bf16.msra.mxu0 0
  %1197 = vmatprep.subr.bf16.mxu0 0
  %1198 = vmatpush1.bf16.msra.mxu0 0
  %1199 = vmatprep.subr.bf16.mxu0 0
  %1200 = vmatpush1.bf16.msra.mxu0 0
  %1201 = vmatprep.subr.bf16.mxu0 0
  %1202 = vmatpush1.bf16.msra.mxu0 0
  %1203 = vmatprep.subr.bf16.mxu0 0
  %1204 = vmatpush1.bf16.msra.mxu0 0
  %1205 = vmatprep.subr.bf16.mxu0 0
  %1206 = vmatpush1.bf16.msra.mxu0 0
  %1207 = vmatprep.subr.bf16.mxu0 0
  %1208 = vmatpush1.bf16.msra.mxu0 0
  %1209 = vmatprep.subr.bf16.mxu0 0
  %1210 = vmatpush1.bf16.msra.mxu0 0
  %1211 = vmatprep.subr.bf16.mxu0 0
  %1212 = vmatpush1.bf16.msra.mxu0 0
  %1213 = vmatprep.subr.bf16.mxu0 0
  %1214 = vmatpush1.bf16.msra.mxu0 0
  %1215 = vmatprep.mubr.bf16.mxu0 0
  %1216 = vmatmul.mubr.bf16.gmra.mrb[0].mxu0 %v1140
  %v1217 = vpop.f32.mrb[0].mxu0
  %v1218 = vpop.f32.mrb[0].mxu0
  %v1219 = vpop.f32.mrb[0].mxu0
  %v1220 = vadd.f32 0.0, %v1219
  %v1221 = vpop.f32.mrb[0].mxu0
  %1222 = vdwg.mxu0
  %v1223 = vadd.f32 %v423, %v1179
  %v1224 = vadd.f32 %v1223, %v1220
  %v1225 = vmul.f32 %v1224, %v34
  %v1226 = vtanh.pop %v1225
  %v1227 = vmul.f32 %v1226, %v34
  %v1228 = vadd.f32 %v1227, %v35
  %v1229 = vmul.f32 %v1228, %v1106
  %1231 = vrot.lane.b32.xlu0 %v1228, 64
  %v1232 = vpop.permute.xlu0 %1231
  %v1234 = vmul.f32 %v1228, %v1232
  %1236 = vrot.lane.b32.xlu0 %v1234, 32
  %v1237 = vpop.permute.xlu0 %1236
  %v1239 = vadd.f32 %v1229, %v1237
  %v1240 = vtanh.pop %v1239
  %1242 = vrot.lane.b32.xlu0 %v1240, 64
  %v1243 = vpop.permute.xlu0 %1242
  %v1245 = vmul.f32 %v1228, %v1243
  %v1246 = vadd.f32 %v267, %v1177
  %v1247 = vmul.f32 %v1246, %v34
  %v1248 = vtanh.pop %v1247
  %v1249 = vmul.f32 %v1248, %v34
  %v1250 = vadd.f32 %v1249, %v35
  %v1251 = vmul.f32 %v1250, %v1128
  %1253 = vrot.lane.b32.xlu0 %v1250, 64
  %v1254 = vpop.permute.xlu0 %1253
  %v1256 = vmul.f32 %v1250, %v1254
  %1258 = vrot.lane.b32.xlu0 %v1256, 32
  %v1259 = vpop.permute.xlu0 %1258
  %v1261 = vadd.f32 %v1251, %v1259
  %v1262 = vtanh.pop %v1261
  %1264 = vrot.lane.b32.xlu0 %v1262, 64
  %v1265 = vpop.permute.xlu0 %1264
  %v1267 = vmul.f32 %v1250, %v1265
  %v1268 = vpack.c.bf16 %v1245, %v1267
  %1270 = vrot.lane.b32.xlu0 %v1268, 32
  %v1271 = vpop.permute.xlu0 %1270
  %v1273 = vsel %vm334, %v1271, 0
  %1275 = vmatprep.subr.bf16.mxu0 %v323
  %1276 = vmatpush1.bf16.msra.mxu0 %v322
  %1277 = vmatprep.subr.bf16.mxu0 %v326
  %1278 = vmatpush1.bf16.msra.mxu0 %v325
  %1279 = vmatprep.subr.bf16.mxu0 0
  %1280 = vmatpush1.bf16.msra.mxu0 0
  %1281 = vmatprep.subr.bf16.mxu0 0
  %1282 = vmatpush1.bf16.msra.mxu0 0
  %1283 = vmatprep.subr.bf16.mxu0 0
  %1284 = vmatpush1.bf16.msra.mxu0 0
  %1285 = vmatprep.subr.bf16.mxu0 0
  %1286 = vmatpush1.bf16.msra.mxu0 0
  %1287 = vmatprep.subr.bf16.mxu0 0
  %1288 = vmatpush1.bf16.msra.mxu0 0
  %1289 = vmatprep.subr.bf16.mxu0 0
  %1290 = vmatpush1.bf16.msra.mxu0 0
  %1291 = vmatprep.subr.bf16.mxu0 0
  %1292 = vmatpush1.bf16.msra.mxu0 0
  %1293 = vmatprep.subr.bf16.mxu0 0
  %1294 = vmatpush1.bf16.msra.mxu0 0
  %1295 = vmatprep.subr.bf16.mxu0 0
  %1296 = vmatpush1.bf16.msra.mxu0 0
  %1297 = vmatprep.subr.bf16.mxu0 0
  %1298 = vmatpush1.bf16.msra.mxu0 0
  %1299 = vmatprep.subr.bf16.mxu0 0
  %1300 = vmatpush1.bf16.msra.mxu0 0
  %1301 = vmatprep.subr.bf16.mxu0 0
  %1302 = vmatpush1.bf16.msra.mxu0 0
  %1303 = vmatprep.subr.bf16.mxu0 0
  %1304 = vmatpush1.bf16.msra.mxu0 0
  %1305 = vmatprep.subr.bf16.mxu0 0
  %1306 = vmatpush1.bf16.msra.mxu0 0
  %1307 = vmatprep.mubr.bf16.mxu0 0
  %1308 = vmatmul.mubr.bf16.gmra.mrb[0].mxu0 %v1273
  %v1309 = vpop.f32.mrb[0].mxu0
  %v1310 = vpop.f32.mrb[0].mxu0
  %v1311 = vadd.f32 0.0, %v1310
  %v1312 = vpop.f32.mrb[0].mxu0
  %v1313 = vpop.f32.mrb[0].mxu0
  %1314 = vdwg.mxu0
  %1315 = vmatprep.subr.bf16.mxu0 0
  %1316 = vmatpush1.bf16.msra.mxu0 %v324
  %1317 = vmatprep.subr.bf16.mxu0 0
  %1318 = vmatpush1.bf16.msra.mxu0 %v327
  %1319 = vmatprep.subr.bf16.mxu0 0
  %1320 = vmatpush1.bf16.msra.mxu0 0
  %1321 = vmatprep.subr.bf16.mxu0 0
  %1322 = vmatpush1.bf16.msra.mxu0 0
  %1323 = vmatprep.subr.bf16.mxu0 0
  %1324 = vmatpush1.bf16.msra.mxu0 0
  %1325 = vmatprep.subr.bf16.mxu0 0
  %1326 = vmatpush1.bf16.msra.mxu0 0
  %1327 = vmatprep.subr.bf16.mxu0 0
  %1328 = vmatpush1.bf16.msra.mxu0 0
  %1329 = vmatprep.subr.bf16.mxu0 0
  %1330 = vmatpush1.bf16.msra.mxu0 0
  %1331 = vmatprep.subr.bf16.mxu0 0
  %1332 = vmatpush1.bf16.msra.mxu0 0
  %1333 = vmatprep.subr.bf16.mxu0 0
  %1334 = vmatpush1.bf16.msra.mxu0 0
  %1335 = vmatprep.subr.bf16.mxu0 0
  %1336 = vmatpush1.bf16.msra.mxu0 0
  %1337 = vmatprep.subr.bf16.mxu0 0
  %1338 = vmatpush1.bf16.msra.mxu0 0
  %1339 = vmatprep.subr.bf16.mxu0 0
  %1340 = vmatpush1.bf16.msra.mxu0 0
  %1341 = vmatprep.subr.bf16.mxu0 0
  %1342 = vmatpush1.bf16.msra.mxu0 0
  %1343 = vmatprep.subr.bf16.mxu0 0
  %1344 = vmatpush1.bf16.msra.mxu0 0
  %1345 = vmatprep.subr.bf16.mxu0 0
  %1346 = vmatpush1.bf16.msra.mxu0 0
  %1347 = vmatprep.mubr.bf16.mxu0 0
  %1348 = vmatmul.mubr.bf16.gmra.mrb[0].mxu0 %v1273
  %v1349 = vpop.f32.mrb[0].mxu0
  %v1350 = vpop.f32.mrb[0].mxu0
  %v1351 = vpop.f32.mrb[0].mxu0
  %v1352 = vadd.f32 0.0, %v1351
  %v1353 = vpop.f32.mrb[0].mxu0
  %1354 = vdwg.mxu0
  %v1355 = vadd.f32 %v423, %v1311
  %v1356 = vadd.f32 %v1355, %v1352
  %v1357 = vmul.f32 %v1356, %v34
  %v1358 = vtanh.pop %v1357
  %v1359 = vmul.f32 %v1358, %v34
  %v1360 = vadd.f32 %v1359, %v35
  %v1361 = vmul.f32 %v1360, %v1239
  %1363 = vrot.lane.b32.xlu0 %v1360, 64
  %v1364 = vpop.permute.xlu0 %1363
  %v1366 = vmul.f32 %v1360, %v1364
  %1368 = vrot.lane.b32.xlu0 %v1366, 32
  %v1369 = vpop.permute.xlu0 %1368
  %v1371 = vadd.f32 %v1361, %v1369
  %v1372 = vtanh.pop %v1371
  %1374 = vrot.lane.b32.xlu0 %v1372, 64
  %v1375 = vpop.permute.xlu0 %1374
  %v1377 = vmul.f32 %v1360, %v1375
  %v1378 = vld [vmem:[%s5] sm:$0x1]
  %v1380 = vlaneseq
  %v1381 = vshrl.u32 %v1380, 7
  %v1382 = vsub.s32 0, %v1381
  %v1383 = vrot.slane %v1378, %v1382
  %1384 = vrot.lane.b32.xlu0 %v1383, 96
  %v1385 = vpop.permute.xlu0 %1384
  %v1387 = vmul.f32 %v1377, %v1385
  %1389 = vrot.lane.b32.xlu0 %v1387, 32
  %v1390 = vpop.permute.xlu0 %1389
  %v1392 = vsel %vm334, %v1390, 0.0
  %1393 = vadd.xlane.f32.xlu0 %v1392
  %v1394 = vpop.xlane.xlu0 %1393
  %v1395 = vld [vmem:[#allocation2] sm:$0x1]
  %v1397 = vlaneseq
  %v1398 = vshrl.u32 %v1397, 7
  %v1399 = vsub.s32 0, %v1398
  %v1400 = vrot.slane %v1395, %v1399
  %v1402 = vadd.f32 %v1394, %v1400
  %vm1403 = vcmask 7168
  %1404 = vst.msk [vmem:[%s7] sm:$0xff] %vm1403, %v1402
  // Predicated region
  $region30: #{lstm_model_forward.1} parent=0 // pred_check
    _
  $region31: #{lstm_model_forward.1} parent=0 // pred_check_branch
    %1406 = sbr.rel (0) target = $region33
  $region32: #{lstm_model_forward.1} parent=0 // pred_region
    _
  $region33: #{lstm_model_forward.1} parent=0 // pred_fallthru
    _
  // Predicated region
  $region34: #{lstm_model_forward.1} parent=0 // pred_check
    _
  $region35: #{lstm_model_forward.1} parent=0 // pred_check_branch
    %1408 = sbr.rel (0) target = $region37
  $region36: #{lstm_model_forward.1} parent=0 // pred_region
    _
  $region37: #{lstm_model_forward.1} parent=0 // pred_fallthru
    _

</llo_original>
